<compile_context>
chip_gen: v6e
topology: v6e:2x2x1
jax: 0.10.0
libtpu: 0.0.40
codegen_flags: <defaults>
</compile_context>

<pallas_src>
import jax
import jax.numpy as jnp
from jax.experimental import pallas as pl
from jax.experimental.pallas import tpu as pltpu

CP = 128  # lane-padded channel width (all matmuls / stores are 128-lane dense)


# ----------------------------------------------------------------------------
# Fused kernel: whole TCN stack + linear head + log_softmax.
# Refs (in order): x, [w1,b1,w2,b2,(wd,bd)] per block, head w, head b, output,
# then one VMEM scratch holding the causally-padded activation (N, PMAX+L, CP).
# ----------------------------------------------------------------------------
def _make_tcn_kernel(*, N, L, K, dilations, has_down, PMAX, n_classes):
    def kernel(*refs):
        it = iter(refs)
        x_ref = next(it)
        blocks = []
        for hd in has_down:
            w1, b1, w2, b2 = next(it), next(it), next(it), next(it)
            wd, bd = (next(it), next(it)) if hd else (None, None)
            blocks.append((w1, b1, w2, b2, wd, bd))
        wh, bh = next(it), next(it)
        o_ref = next(it)
        buf = next(it)  # VMEM scratch (N, PMAX + L, CP)

        # In-kernel causal padding: zero rows [0, PMAX), data rows after.
        buf[:, 0:PMAX, :] = jnp.zeros((N, PMAX, CP), jnp.float32)
        buf[:, PMAX:PMAX + L, :] = x_ref[...].astype(jnp.float32)

        def dilated_causal_conv(d, w_ref, b_ref):
            # out[n, t] = sum_k buf[n, PMAX + t - (K-1-k)*d] @ W[k]  + bias
            # (matches PyTorch conv1d(pad=(K-1)*d) followed by Chomp1d).
            acc = None
            for k in range(K):                      # K is tiny -> unrolled
                start = PMAX - (K - 1 - k) * d      # static slice start
                xk = buf[:, start:start + L, :].reshape(N * L, CP)
                t = jnp.dot(xk, w_ref[k], preferred_element_type=jnp.float32)
                acc = t if acc is None else acc + t
            return acc + b_ref[...]

        for (w1, b1, w2, b2, wd, bd), d in zip(blocks, dilations):
            # residual input, loaded (as a value) before buf is overwritten
            res = buf[:, PMAX:PMAX + L, :].reshape(N * L, CP)
            out1 = jnp.maximum(dilated_causal_conv(d, w1, b1), 0.0)
            buf[:, PMAX:PMAX + L, :] = out1.reshape(N, L, CP)
            out2 = jnp.maximum(dilated_causal_conv(d, w2, b2), 0.0)
            if wd is not None:                      # 1x1 downsample conv
                res = jnp.dot(res, wd[0],
                              preferred_element_type=jnp.float32) + bd[...]
            y = jnp.maximum(out2 + res, 0.0)        # residual add + ReLU (fused)
            buf[:, PMAX:PMAX + L, :] = y.reshape(N, L, CP)

        # Fused head on the last timestep only: linear + masked log_softmax.
        last = buf[:, PMAX + L - 1, :]              # (N, CP) final-block output
        logits = jnp.dot(last, wh[...], preferred_element_type=jnp.float32) + bh[...]
        col = jax.lax.broadcasted_iota(jnp.int32, (N, CP), 1)
        logits = jnp.where(col < n_classes, logits, -1e30)  # mask padded classes
        m = jnp.max(logits, axis=-1, keepdims=True)
        s = logits - m
        lse = jnp.log(jnp.sum(jnp.exp(s), axis=-1, keepdims=True))
        o_ref[...] = (s - lse).astype(o_ref.dtype)

    return kernel


def build_tcn_forward(*, input_size, output_size, num_channels, kernel_size, N, L):
    K = kernel_size
    dilations = [2 ** i for i in range(len(num_channels))]
    has_down = []
    in_ch = input_size
    for oc in num_channels:
        has_down.append(in_ch != oc)
        in_ch = oc
    p_need = (K - 1) * dilations[-1]
    PMAX = max(8, ((p_need + 7) // 8) * 8)  # sublane-aligned causal pad region

    kernel = _make_tcn_kernel(N=N, L=L, K=K, dilations=dilations,
                              has_down=has_down, PMAX=PMAX,
                              n_classes=output_size)

    def forward(inputs, pparams):
        # inputs: (N, C_in, L, 1)  (PyTorch layout; forward squeezes dim -1)
        x = jnp.squeeze(inputs, axis=-1)                       # (N, C, L)
        x = jnp.transpose(x, (0, 2, 1)).astype(jnp.float32)    # (N, L, C)
        # one tiny lane-pad of the network input (activations never padded again)
        x = jnp.pad(x, ((0, 0), (0, 0), (0, CP - x.shape[-1])))
        flat = [x]
        for blk, hd in zip(pparams["blocks"], has_down):
            flat += [blk["w1"], blk["b1"], blk["w2"], blk["b2"]]
            if hd:
                flat += [blk["wd"], blk["bd"]]
        flat += [pparams["lin_w"], pparams["lin_b"]]
        out = pl.pallas_call(
            kernel,
            out_shape=jax.ShapeDtypeStruct((N, CP), jnp.float32),
            scratch_shapes=[pltpu.VMEM((N, PMAX + L, CP), jnp.float32)],
        )(*flat)
        # real classes only (lanes beyond output_size are padding)
        return out[:, :output_size]

    return jax.jit(forward)


# ----------------------------------------------------------------------------
# Parameter construction (deterministic, synthetic, PyTorch-faithful layout)
# plus a one-time lane-padding step so the kernel only sees 128-lane weights.
# ----------------------------------------------------------------------------
def _weight_norm(v, g):
    """PyTorch weight_norm (dim=0): w = g * v / ||v|| per output channel."""
    norm = jnp.sqrt(jnp.sum(v * v, axis=(1, 2), keepdims=True))
    return g * v / norm


def _to_kernel_layout(w_pt):
    """(Cout, Cin, K) PyTorch conv weight -> (K, Cin, Cout) kernel weight."""
    return jnp.transpose(w_pt, (2, 1, 0))


def make_tcn_params(key, input_size, output_size, num_channels, kernel_size):
    params = {"blocks": []}
    in_ch = input_size
    for out_ch in num_channels:
        blk = {}
        for name, ci, co in (("1", in_ch, out_ch), ("2", out_ch, out_ch)):
            key, k1, k2 = jax.random.split(key, 3)
            v = 0.01 * jax.random.normal(k1, (co, ci, kernel_size), jnp.float32)
            g = jnp.sqrt(jnp.sum(v * v, axis=(1, 2), keepdims=True))  # weight_norm init: g = ||v||
            blk["w" + name] = _to_kernel_layout(_weight_norm(v, g))
            blk["b" + name] = 0.01 * jax.random.normal(k2, (co,), jnp.float32)
        if in_ch != out_ch:
            key, k1, k2 = jax.random.split(key, 3)
            wd = 0.01 * jax.random.normal(k1, (out_ch, in_ch, 1), jnp.float32)
            blk["wd"] = _to_kernel_layout(wd)
            blk["bd"] = 0.01 * jax.random.normal(k2, (out_ch,), jnp.float32)
        params["blocks"].append(blk)
        in_ch = out_ch
    key, k1, k2 = jax.random.split(key, 3)
    params["lin_w"] = 0.05 * jax.random.normal(k1, (num_channels[-1], output_size), jnp.float32)
    params["lin_b"] = 0.05 * jax.random.normal(k2, (output_size,), jnp.float32)
    return params


def pad_params_to_lanes(params):
    """Zero-pad every weight/bias to CP lanes (done once, outside the kernel)."""
    def pw(w):  # (K, Cin, Cout) -> (K, CP, CP)
        k, ci, co = w.shape
        return jnp.pad(w, ((0, 0), (0, CP - ci), (0, CP - co)))

    def pb(b):  # (C,) -> (1, CP)
        return jnp.pad(b, (0, CP - b.shape[0])).reshape(1, CP)

    out = {"blocks": []}
    for blk in params["blocks"]:
        nb = {"w1": pw(blk["w1"]), "b1": pb(blk["b1"]),
              "w2": pw(blk["w2"]), "b2": pb(blk["b2"])}
        if "wd" in blk:
            nb["wd"] = pw(blk["wd"])
            nb["bd"] = pb(blk["bd"])
        out["blocks"].append(nb)
    ci, co = params["lin_w"].shape
    out["lin_w"] = jnp.pad(params["lin_w"], ((0, CP - ci), (0, CP - co)))
    out["lin_b"] = pb(params["lin_b"])
    return out


# ----------------------------------------------------------------------------
# Pure-JAX reference (lax.conv based) mirroring the PyTorch module, for a
# correctness cross-check of the fused kernel.
# ----------------------------------------------------------------------------
def _ref_conv1d(x_ncl, w_kic, b, dilation, padding):
    w_oik = jnp.transpose(w_kic, (2, 1, 0))  # back to (Cout, Cin, K)
    y = jax.lax.conv_general_dilated(
        x_ncl, w_oik, window_strides=(1,), padding=[(padding, padding)],
        rhs_dilation=(dilation,), dimension_numbers=("NCH", "OIH", "NCH"),
        precision=jax.lax.Precision.HIGHEST)
    return y + b[None, :, None]


def ref_forward(inputs, params, kernel_size):
    x = jnp.squeeze(inputs, axis=-1)  # (N, C, L)
    K = kernel_size
    L = x.shape[-1]
    for i, blk in enumerate(params["blocks"]):
        d = 2 ** i
        P = (K - 1) * d
        out = jax.nn.relu(_ref_conv1d(x, blk["w1"], blk["b1"], d, P)[:, :, :L])
        out = jax.nn.relu(_ref_conv1d(out, blk["w2"], blk["b2"], d, P)[:, :, :L])
        res = _ref_conv1d(x, blk["wd"], blk["bd"], 1, 0) if "wd" in blk else x
        x = jax.nn.relu(out + res)
    last = x[:, :, -1]
    logits = jnp.dot(last, params["lin_w"],
                     precision=jax.lax.Precision.HIGHEST) + params["lin_b"]
    return jax.nn.log_softmax(logits, axis=1)


if __name__ == "__main__":
    key = jax.random.PRNGKey(0)
    N, C_in, L = 2, 4, 16
    num_channels = [8, 16]
    kernel_size = 2
    output_size = 5

    key, kx, kp = jax.random.split(key, 3)
    x = jax.random.normal(kx, (N, C_in, L, 1), jnp.float32)
    params = make_tcn_params(kp, C_in, output_size, num_channels, kernel_size)
    pparams = pad_params_to_lanes(params)

    forward = build_tcn_forward(input_size=C_in, output_size=output_size,
                                num_channels=num_channels,
                                kernel_size=kernel_size, N=N, L=L)
    out = forward(x, pparams)
    jax.block_until_ready(out)

    assert out.shape == (N, output_size)
    # log_softmax rows must sum to ~1 in prob space
    assert jnp.allclose(jnp.sum(jnp.exp(out), axis=1), 1.0, atol=1e-4)
    # cross-check the fused Pallas kernel against a pure-JAX reference
    ref = ref_forward(x, params, kernel_size)
    assert jnp.allclose(out, ref, atol=2e-3, rtol=2e-3)
    print("KERNEL_OK")
</pallas_src>

<mosaic_0001>
module attributes {stable_mosaic.version = 11 : i64} {
  func.func @kernel(%arg0: memref<2x16x128xf32, #tpu.memory_space<vmem>>, %arg1: memref<2x128x128xf32, #tpu.memory_space<vmem>>, %arg2: memref<1x128xf32, #tpu.memory_space<vmem>>, %arg3: memref<2x128x128xf32, #tpu.memory_space<vmem>>, %arg4: memref<1x128xf32, #tpu.memory_space<vmem>>, %arg5: memref<1x128x128xf32, #tpu.memory_space<vmem>>, %arg6: memref<1x128xf32, #tpu.memory_space<vmem>>, %arg7: memref<2x128x128xf32, #tpu.memory_space<vmem>>, %arg8: memref<1x128xf32, #tpu.memory_space<vmem>>, %arg9: memref<2x128x128xf32, #tpu.memory_space<vmem>>, %arg10: memref<1x128xf32, #tpu.memory_space<vmem>>, %arg11: memref<1x128x128xf32, #tpu.memory_space<vmem>>, %arg12: memref<1x128xf32, #tpu.memory_space<vmem>>, %arg13: memref<128x128xf32, #tpu.memory_space<vmem>>, %arg14: memref<1x128xf32, #tpu.memory_space<vmem>>, %arg15: memref<2x128xf32, #tpu.memory_space<vmem>>, %arg16: memref<2x24x128xf32, #tpu.memory_space<vmem>>) attributes {dimension_semantics = [], scalar_prefetch = 0 : i64, scratch_operands = 1 : i64, tpu.core_type = #tpu.core_type<tc>} {
    %cst = arith.constant 0.000000e+00 : f32
    %0 = vector.broadcast %cst : f32 to vector<2x8x128xf32>
    %c0 = arith.constant 0 : index
    %c0_0 = arith.constant 0 : index
    %c0_1 = arith.constant 0 : index
    %1 = vector.load %arg16[%c0, %c0_0, %c0_1] : memref<2x24x128xf32, #tpu.memory_space<vmem>>, vector<2x8x128xf32>
    tpu.vector_store %arg16[%c0, %c0_0, %c0_1], %0 {strides = array<i32>} : memref<2x24x128xf32, #tpu.memory_space<vmem>>, vector<2x8x128xf32>,
    %c0_2 = arith.constant 0 : index
    %c0_3 = arith.constant 0 : index
    %c0_4 = arith.constant 0 : index
    %2 = vector.load %arg0[%c0_2, %c0_3, %c0_4] : memref<2x16x128xf32, #tpu.memory_space<vmem>>, vector<2x16x128xf32>
    %c0_5 = arith.constant 0 : index
    %c8 = arith.constant 8 : index
    %c0_6 = arith.constant 0 : index
    %3 = vector.load %arg16[%c0_5, %c8, %c0_6] : memref<2x24x128xf32, #tpu.memory_space<vmem>>, vector<2x16x128xf32>
    tpu.vector_store %arg16[%c0_5, %c8, %c0_6], %2 {strides = array<i32>} : memref<2x24x128xf32, #tpu.memory_space<vmem>>, vector<2x16x128xf32>,
    %c0_7 = arith.constant 0 : index
    %c8_8 = arith.constant 8 : index
    %c0_9 = arith.constant 0 : index
    %4 = vector.load %arg16[%c0_7, %c8_8, %c0_9] : memref<2x24x128xf32, #tpu.memory_space<vmem>>, vector<2x16x128xf32>
    %5 = vector.shape_cast %4 : vector<2x16x128xf32> to vector<32x128xf32>
    %c0_10 = arith.constant 0 : index
    %c7 = arith.constant 7 : index
    %c0_11 = arith.constant 0 : index
    %6 = vector.load %arg16[%c0_10, %c7, %c0_11] : memref<2x24x128xf32, #tpu.memory_space<vmem>>, vector<2x16x128xf32>
    %7 = vector.shape_cast %6 : vector<2x16x128xf32> to vector<32x128xf32>
    %c0_12 = arith.constant 0 : index
    %c0_13 = arith.constant 0 : index
    %c0_14 = arith.constant 0 : index
    %8 = vector.load %arg1[%c0_12, %c0_13, %c0_14] : memref<2x128x128xf32, #tpu.memory_space<vmem>>, vector<1x128x128xf32>
    %9 = vector.shape_cast %8 : vector<1x128x128xf32> to vector<128x128xf32>
    %cst_15 = arith.constant dense<0.000000e+00> : vector<32x128xf32>
    %10 = tpu.matmul %7, %9, %cst_15 {dimension_numbers = #tpu.dot_dimension_numbers<[1], [0], [0], [1], [0, 0, 1, 1], [], []>} : vector<32x128xf32>, vector<128x128xf32>, vector<32x128xf32> -> vector<32x128xf32>
    %c0_16 = arith.constant 0 : index
    %c8_17 = arith.constant 8 : index
    %c0_18 = arith.constant 0 : index
    %11 = vector.load %arg16[%c0_16, %c8_17, %c0_18] : memref<2x24x128xf32, #tpu.memory_space<vmem>>, vector<2x16x128xf32>
    %12 = vector.shape_cast %11 : vector<2x16x128xf32> to vector<32x128xf32>
    %c1 = arith.constant 1 : index
    %c0_19 = arith.constant 0 : index
    %c0_20 = arith.constant 0 : index
    %13 = vector.load %arg1[%c1, %c0_19, %c0_20] : memref<2x128x128xf32, #tpu.memory_space<vmem>>, vector<1x128x128xf32>
    %14 = vector.shape_cast %13 : vector<1x128x128xf32> to vector<128x128xf32>
    %cst_21 = arith.constant dense<0.000000e+00> : vector<32x128xf32>
    %15 = tpu.matmul %12, %14, %cst_21 {dimension_numbers = #tpu.dot_dimension_numbers<[1], [0], [0], [1], [0, 0, 1, 1], [], []>} : vector<32x128xf32>, vector<128x128xf32>, vector<32x128xf32> -> vector<32x128xf32>
    %16 = arith.addf %10, %15 : vector<32x128xf32>
    %c0_22 = arith.constant 0 : index
    %c0_23 = arith.constant 0 : index
    %17 = vector.load %arg2[%c0_22, %c0_23] : memref<1x128xf32, #tpu.memory_space<vmem>>, vector<1x128xf32>
    %18 = vector.broadcast %17 : vector<1x128xf32> to vector<32x128xf32>
    %19 = arith.addf %16, %18 : vector<32x128xf32>
    %cst_24 = arith.constant 0.000000e+00 : f32
    %20 = vector.broadcast %cst_24 : f32 to vector<32x128xf32>
    %21 = arith.maximumf %19, %20 : vector<32x128xf32>
    %22 = vector.shape_cast %21 : vector<32x128xf32> to vector<2x16x128xf32>
    %c0_25 = arith.constant 0 : index
    %c8_26 = arith.constant 8 : index
    %c0_27 = arith.constant 0 : index
    %23 = vector.load %arg16[%c0_25, %c8_26, %c0_27] : memref<2x24x128xf32, #tpu.memory_space<vmem>>, vector<2x16x128xf32>
    tpu.vector_store %arg16[%c0_25, %c8_26, %c0_27], %22 {strides = array<i32>} : memref<2x24x128xf32, #tpu.memory_space<vmem>>, vector<2x16x128xf32>,
    %c0_28 = arith.constant 0 : index
    %c7_29 = arith.constant 7 : index
    %c0_30 = arith.constant 0 : index
    %24 = vector.load %arg16[%c0_28, %c7_29, %c0_30] : memref<2x24x128xf32, #tpu.memory_space<vmem>>, vector<2x16x128xf32>
    %25 = vector.shape_cast %24 : vector<2x16x128xf32> to vector<32x128xf32>
    %c0_31 = arith.constant 0 : index
    %c0_32 = arith.constant 0 : index
    %c0_33 = arith.constant 0 : index
    %26 = vector.load %arg3[%c0_31, %c0_32, %c0_33] : memref<2x128x128xf32, #tpu.memory_space<vmem>>, vector<1x128x128xf32>
    %27 = vector.shape_cast %26 : vector<1x128x128xf32> to vector<128x128xf32>
    %cst_34 = arith.constant dense<0.000000e+00> : vector<32x128xf32>
    %28 = tpu.matmul %25, %27, %cst_34 {dimension_numbers = #tpu.dot_dimension_numbers<[1], [0], [0], [1], [0, 0, 1, 1], [], []>} : vector<32x128xf32>, vector<128x128xf32>, vector<32x128xf32> -> vector<32x128xf32>
    %c0_35 = arith.constant 0 : index
    %c8_36 = arith.constant 8 : index
    %c0_37 = arith.constant 0 : index
    %29 = vector.load %arg16[%c0_35, %c8_36, %c0_37] : memref<2x24x128xf32, #tpu.memory_space<vmem>>, vector<2x16x128xf32>
    %30 = vector.shape_cast %29 : vector<2x16x128xf32> to vector<32x128xf32>
    %c1_38 = arith.constant 1 : index
    %c0_39 = arith.constant 0 : index
    %c0_40 = arith.constant 0 : index
    %31 = vector.load %arg3[%c1_38, %c0_39, %c0_40] : memref<2x128x128xf32, #tpu.memory_space<vmem>>, vector<1x128x128xf32>
    %32 = vector.shape_cast %31 : vector<1x128x128xf32> to vector<128x128xf32>
    %cst_41 = arith.constant dense<0.000000e+00> : vector<32x128xf32>
    %33 = tpu.matmul %30, %32, %cst_41 {dimension_numbers = #tpu.dot_dimension_numbers<[1], [0], [0], [1], [0, 0, 1, 1], [], []>} : vector<32x128xf32>, vector<128x128xf32>, vector<32x128xf32> -> vector<32x128xf32>
    %34 = arith.addf %28, %33 : vector<32x128xf32>
    %c0_42 = arith.constant 0 : index
    %c0_43 = arith.constant 0 : index
    %35 = vector.load %arg4[%c0_42, %c0_43] : memref<1x128xf32, #tpu.memory_space<vmem>>, vector<1x128xf32>
    %36 = vector.broadcast %35 : vector<1x128xf32> to vector<32x128xf32>
    %37 = arith.addf %34, %36 : vector<32x128xf32>
    %cst_44 = arith.constant 0.000000e+00 : f32
    %38 = vector.broadcast %cst_44 : f32 to vector<32x128xf32>
    %39 = arith.maximumf %37, %38 : vector<32x128xf32>
    %c0_45 = arith.constant 0 : index
    %c0_46 = arith.constant 0 : index
    %c0_47 = arith.constant 0 : index
    %40 = vector.load %arg5[%c0_45, %c0_46, %c0_47] : memref<1x128x128xf32, #tpu.memory_space<vmem>>, vector<1x128x128xf32>
    %41 = vector.shape_cast %40 : vector<1x128x128xf32> to vector<128x128xf32>
    %cst_48 = arith.constant dense<0.000000e+00> : vector<32x128xf32>
    %42 = tpu.matmul %5, %41, %cst_48 {dimension_numbers = #tpu.dot_dimension_numbers<[1], [0], [0], [1], [0, 0, 1, 1], [], []>} : vector<32x128xf32>, vector<128x128xf32>, vector<32x128xf32> -> vector<32x128xf32>
    %c0_49 = arith.constant 0 : index
    %c0_50 = arith.constant 0 : index
    %43 = vector.load %arg6[%c0_49, %c0_50] : memref<1x128xf32, #tpu.memory_space<vmem>>, vector<1x128xf32>
    %44 = vector.broadcast %43 : vector<1x128xf32> to vector<32x128xf32>
    %45 = arith.addf %42, %44 : vector<32x128xf32>
    %46 = arith.addf %39, %45 : vector<32x128xf32>
    %cst_51 = arith.constant 0.000000e+00 : f32
    %47 = vector.broadcast %cst_51 : f32 to vector<32x128xf32>
    %48 = arith.maximumf %46, %47 : vector<32x128xf32>
    %49 = vector.shape_cast %48 : vector<32x128xf32> to vector<2x16x128xf32>
    %c0_52 = arith.constant 0 : index
    %c8_53 = arith.constant 8 : index
    %c0_54 = arith.constant 0 : index
    %50 = vector.load %arg16[%c0_52, %c8_53, %c0_54] : memref<2x24x128xf32, #tpu.memory_space<vmem>>, vector<2x16x128xf32>
    tpu.vector_store %arg16[%c0_52, %c8_53, %c0_54], %49 {strides = array<i32>} : memref<2x24x128xf32, #tpu.memory_space<vmem>>, vector<2x16x128xf32>,
    %c0_55 = arith.constant 0 : index
    %c8_56 = arith.constant 8 : index
    %c0_57 = arith.constant 0 : index
    %51 = vector.load %arg16[%c0_55, %c8_56, %c0_57] : memref<2x24x128xf32, #tpu.memory_space<vmem>>, vector<2x16x128xf32>
    %52 = vector.shape_cast %51 : vector<2x16x128xf32> to vector<32x128xf32>
    %c0_58 = arith.constant 0 : index
    %c6 = arith.constant 6 : index
    %c0_59 = arith.constant 0 : index
    %53 = vector.load %arg16[%c0_58, %c6, %c0_59] : memref<2x24x128xf32, #tpu.memory_space<vmem>>, vector<2x16x128xf32>
    %54 = vector.shape_cast %53 : vector<2x16x128xf32> to vector<32x128xf32>
    %c0_60 = arith.constant 0 : index
    %c0_61 = arith.constant 0 : index
    %c0_62 = arith.constant 0 : index
    %55 = vector.load %arg7[%c0_60, %c0_61, %c0_62] : memref<2x128x128xf32, #tpu.memory_space<vmem>>, vector<1x128x128xf32>
    %56 = vector.shape_cast %55 : vector<1x128x128xf32> to vector<128x128xf32>
    %cst_63 = arith.constant dense<0.000000e+00> : vector<32x128xf32>
    %57 = tpu.matmul %54, %56, %cst_63 {dimension_numbers = #tpu.dot_dimension_numbers<[1], [0], [0], [1], [0, 0, 1, 1], [], []>} : vector<32x128xf32>, vector<128x128xf32>, vector<32x128xf32> -> vector<32x128xf32>
    %c0_64 = arith.constant 0 : index
    %c8_65 = arith.constant 8 : index
    %c0_66 = arith.constant 0 : index
    %58 = vector.load %arg16[%c0_64, %c8_65, %c0_66] : memref<2x24x128xf32, #tpu.memory_space<vmem>>, vector<2x16x128xf32>
    %59 = vector.shape_cast %58 : vector<2x16x128xf32> to vector<32x128xf32>
    %c1_67 = arith.constant 1 : index
    %c0_68 = arith.constant 0 : index
    %c0_69 = arith.constant 0 : index
    %60 = vector.load %arg7[%c1_67, %c0_68, %c0_69] : memref<2x128x128xf32, #tpu.memory_space<vmem>>, vector<1x128x128xf32>
    %61 = vector.shape_cast %60 : vector<1x128x128xf32> to vector<128x128xf32>
    %cst_70 = arith.constant dense<0.000000e+00> : vector<32x128xf32>
    %62 = tpu.matmul %59, %61, %cst_70 {dimension_numbers = #tpu.dot_dimension_numbers<[1], [0], [0], [1], [0, 0, 1, 1], [], []>} : vector<32x128xf32>, vector<128x128xf32>, vector<32x128xf32> -> vector<32x128xf32>
    %63 = arith.addf %57, %62 : vector<32x128xf32>
    %c0_71 = arith.constant 0 : index
    %c0_72 = arith.constant 0 : index
    %64 = vector.load %arg8[%c0_71, %c0_72] : memref<1x128xf32, #tpu.memory_space<vmem>>, vector<1x128xf32>
    %65 = vector.broadcast %64 : vector<1x128xf32> to vector<32x128xf32>
    %66 = arith.addf %63, %65 : vector<32x128xf32>
    %cst_73 = arith.constant 0.000000e+00 : f32
    %67 = vector.broadcast %cst_73 : f32 to vector<32x128xf32>
    %68 = arith.maximumf %66, %67 : vector<32x128xf32>
    %69 = vector.shape_cast %68 : vector<32x128xf32> to vector<2x16x128xf32>
    %c0_74 = arith.constant 0 : index
    %c8_75 = arith.constant 8 : index
    %c0_76 = arith.constant 0 : index
    %70 = vector.load %arg16[%c0_74, %c8_75, %c0_76] : memref<2x24x128xf32, #tpu.memory_space<vmem>>, vector<2x16x128xf32>
    tpu.vector_store %arg16[%c0_74, %c8_75, %c0_76], %69 {strides = array<i32>} : memref<2x24x128xf32, #tpu.memory_space<vmem>>, vector<2x16x128xf32>,
    %c0_77 = arith.constant 0 : index
    %c6_78 = arith.constant 6 : index
    %c0_79 = arith.constant 0 : index
    %71 = vector.load %arg16[%c0_77, %c6_78, %c0_79] : memref<2x24x128xf32, #tpu.memory_space<vmem>>, vector<2x16x128xf32>
    %72 = vector.shape_cast %71 : vector<2x16x128xf32> to vector<32x128xf32>
    %c0_80 = arith.constant 0 : index
    %c0_81 = arith.constant 0 : index
    %c0_82 = arith.constant 0 : index
    %73 = vector.load %arg9[%c0_80, %c0_81, %c0_82] : memref<2x128x128xf32, #tpu.memory_space<vmem>>, vector<1x128x128xf32>
    %74 = vector.shape_cast %73 : vector<1x128x128xf32> to vector<128x128xf32>
    %cst_83 = arith.constant dense<0.000000e+00> : vector<32x128xf32>
    %75 = tpu.matmul %72, %74, %cst_83 {dimension_numbers = #tpu.dot_dimension_numbers<[1], [0], [0], [1], [0, 0, 1, 1], [], []>} : vector<32x128xf32>, vector<128x128xf32>, vector<32x128xf32> -> vector<32x128xf32>
    %c0_84 = arith.constant 0 : index
    %c8_85 = arith.constant 8 : index
    %c0_86 = arith.constant 0 : index
    %76 = vector.load %arg16[%c0_84, %c8_85, %c0_86] : memref<2x24x128xf32, #tpu.memory_space<vmem>>, vector<2x16x128xf32>
    %77 = vector.shape_cast %76 : vector<2x16x128xf32> to vector<32x128xf32>
    %c1_87 = arith.constant 1 : index
    %c0_88 = arith.constant 0 : index
    %c0_89 = arith.constant 0 : index
    %78 = vector.load %arg9[%c1_87, %c0_88, %c0_89] : memref<2x128x128xf32, #tpu.memory_space<vmem>>, vector<1x128x128xf32>
    %79 = vector.shape_cast %78 : vector<1x128x128xf32> to vector<128x128xf32>
    %cst_90 = arith.constant dense<0.000000e+00> : vector<32x128xf32>
    %80 = tpu.matmul %77, %79, %cst_90 {dimension_numbers = #tpu.dot_dimension_numbers<[1], [0], [0], [1], [0, 0, 1, 1], [], []>} : vector<32x128xf32>, vector<128x128xf32>, vector<32x128xf32> -> vector<32x128xf32>
    %81 = arith.addf %75, %80 : vector<32x128xf32>
    %c0_91 = arith.constant 0 : index
    %c0_92 = arith.constant 0 : index
    %82 = vector.load %arg10[%c0_91, %c0_92] : memref<1x128xf32, #tpu.memory_space<vmem>>, vector<1x128xf32>
    %83 = vector.broadcast %82 : vector<1x128xf32> to vector<32x128xf32>
    %84 = arith.addf %81, %83 : vector<32x128xf32>
    %cst_93 = arith.constant 0.000000e+00 : f32
    %85 = vector.broadcast %cst_93 : f32 to vector<32x128xf32>
    %86 = arith.maximumf %84, %85 : vector<32x128xf32>
    %c0_94 = arith.constant 0 : index
    %c0_95 = arith.constant 0 : index
    %c0_96 = arith.constant 0 : index
    %87 = vector.load %arg11[%c0_94, %c0_95, %c0_96] : memref<1x128x128xf32, #tpu.memory_space<vmem>>, vector<1x128x128xf32>
    %88 = vector.shape_cast %87 : vector<1x128x128xf32> to vector<128x128xf32>
    %cst_97 = arith.constant dense<0.000000e+00> : vector<32x128xf32>
    %89 = tpu.matmul %52, %88, %cst_97 {dimension_numbers = #tpu.dot_dimension_numbers<[1], [0], [0], [1], [0, 0, 1, 1], [], []>} : vector<32x128xf32>, vector<128x128xf32>, vector<32x128xf32> -> vector<32x128xf32>
    %c0_98 = arith.constant 0 : index
    %c0_99 = arith.constant 0 : index
    %90 = vector.load %arg12[%c0_98, %c0_99] : memref<1x128xf32, #tpu.memory_space<vmem>>, vector<1x128xf32>
    %91 = vector.broadcast %90 : vector<1x128xf32> to vector<32x128xf32>
    %92 = arith.addf %89, %91 : vector<32x128xf32>
    %93 = arith.addf %86, %92 : vector<32x128xf32>
    %cst_100 = arith.constant 0.000000e+00 : f32
    %94 = vector.broadcast %cst_100 : f32 to vector<32x128xf32>
    %95 = arith.maximumf %93, %94 : vector<32x128xf32>
    %96 = vector.shape_cast %95 : vector<32x128xf32> to vector<2x16x128xf32>
    %c0_101 = arith.constant 0 : index
    %c8_102 = arith.constant 8 : index
    %c0_103 = arith.constant 0 : index
    %97 = vector.load %arg16[%c0_101, %c8_102, %c0_103] : memref<2x24x128xf32, #tpu.memory_space<vmem>>, vector<2x16x128xf32>
    tpu.vector_store %arg16[%c0_101, %c8_102, %c0_103], %96 {strides = array<i32>} : memref<2x24x128xf32, #tpu.memory_space<vmem>>, vector<2x16x128xf32>,
    %c0_104 = arith.constant 0 : index
    %c23 = arith.constant 23 : index
    %c0_105 = arith.constant 0 : index
    %98 = vector.load %arg16[%c0_104, %c23, %c0_105] : memref<2x24x128xf32, #tpu.memory_space<vmem>>, vector<2x1x128xf32>
    %99 = vector.shape_cast %98 : vector<2x1x128xf32> to vector<2x128xf32>
    %c0_106 = arith.constant 0 : index
    %c0_107 = arith.constant 0 : index
    %100 = vector.load %arg13[%c0_106, %c0_107] : memref<128x128xf32, #tpu.memory_space<vmem>>, vector<128x128xf32>
    %cst_108 = arith.constant dense<0.000000e+00> : vector<2x128xf32>
    %101 = tpu.matmul %99, %100, %cst_108 {dimension_numbers = #tpu.dot_dimension_numbers<[1], [0], [0], [1], [0, 0, 1, 1], [], []>} : vector<2x128xf32>, vector<128x128xf32>, vector<2x128xf32> -> vector<2x128xf32>
    %c0_109 = arith.constant 0 : index
    %c0_110 = arith.constant 0 : index
    %102 = vector.load %arg14[%c0_109, %c0_110] : memref<1x128xf32, #tpu.memory_space<vmem>>, vector<1x128xf32>
    %103 = vector.broadcast %102 : vector<1x128xf32> to vector<2x128xf32>
    %104 = arith.addf %101, %103 : vector<2x128xf32>
    %105 = tpu.iota {dimensions = array<i32: 1>} : vector<2x128xi32>
    %c5_i32 = arith.constant 5 : i32
    %106 = vector.broadcast %c5_i32 : i32 to vector<2x128xi32>
    %107 = arith.cmpi slt, %105, %106 : vector<2x128xi32>
    %cst_111 = arith.constant -1.000000e+30 : f32
    %108 = vector.broadcast %cst_111 : f32 to vector<2x128xf32>
    %109 = arith.select %107, %104, %108 : vector<2x128xi1>, vector<2x128xf32>
    %cst_112 = arith.constant dense<0xFF800000> : vector<2xf32>
    %110 = vector.multi_reduction <maximumf>, %109, %cst_112 [1] : vector<2x128xf32> to vector<2xf32>
    %111 = vector.shape_cast %110 : vector<2xf32> to vector<2x1xf32>
    %112 = vector.broadcast %111 : vector<2x1xf32> to vector<2x128xf32>
    %113 = arith.subf %109, %112 : vector<2x128xf32>
    %114 = math.exp %113 : vector<2x128xf32>
    %cst_113 = arith.constant dense<0.000000e+00> : vector<2xf32>
    %115 = vector.multi_reduction <add>, %114, %cst_113 [1] : vector<2x128xf32> to vector<2xf32>
    %116 = vector.shape_cast %115 : vector<2xf32> to vector<2x1xf32>
    %117 = math.log %116 : vector<2x1xf32>
    %118 = vector.broadcast %117 : vector<2x1xf32> to vector<2x128xf32>
    %119 = arith.subf %113, %118 : vector<2x128xf32>
    %c0_114 = arith.constant 0 : index
    %c0_115 = arith.constant 0 : index
    %120 = vector.load %arg15[%c0_114, %c0_115] : memref<2x128xf32, #tpu.memory_space<vmem>>, vector<2x128xf32>
    tpu.vector_store %arg15[%c0_114, %c0_115], %119 {strides = array<i32>} : memref<2x128xf32, #tpu.memory_space<vmem>>, vector<2x128xf32>,
    return
  }
}

</mosaic_0001>

<llo_original>
// kernel: forward.1
$region0: #{forward.1}
  #allocation0 [shape = 'u32[]', space=smem, size = 0x4, offset = 0x4, fixed_abs, tag = 'smem constant byte address 0x4 - core index']
  #allocation1 [shape = 'u32[144,128]{1,0:T(1,128)}', space=vmem, size = 0x12000, scoped, tag = 'internal scratch']
  #allocation2 [shape = 'f32[2,24,128]{2,1,0:T(8,128)}', space=vmem, size = 0x6000, scoped, tag = 'scratch operand']
  %s0 = inlined_call_operand.vmem [shape: f32[2,16,128], index: 0, kind: input, shape index: {}]
  %s1 = inlined_call_operand.hbm [shape: f32[2,128,128], index: 1, kind: input, shape index: {}]
  %s2 = inlined_call_operand.vmem [shape: f32[1,128], index: 2, kind: input, shape index: {}]
  %s3 = inlined_call_operand.hbm [shape: f32[2,128,128], index: 3, kind: input, shape index: {}]
  %s4 = inlined_call_operand.vmem [shape: f32[1,128], index: 4, kind: input, shape index: {}]
  %s5 = inlined_call_operand.hbm [shape: f32[1,128,128], index: 5, kind: input, shape index: {}]
  %s6 = inlined_call_operand.hbm [shape: f32[1,128], index: 6, kind: input, shape index: {}]
  %s7 = inlined_call_operand.hbm [shape: f32[2,128,128], index: 7, kind: input, shape index: {}]
  %s8 = inlined_call_operand.hbm [shape: f32[1,128], index: 8, kind: input, shape index: {}]
  %s9 = inlined_call_operand.hbm [shape: f32[2,128,128], index: 9, kind: input, shape index: {}]
  %s10 = inlined_call_operand.hbm [shape: f32[1,128], index: 10, kind: input, shape index: {}]
  %s11 = inlined_call_operand.vmem [shape: f32[1,128,128], index: 11, kind: input, shape index: {}]
  %s12 = inlined_call_operand.hbm [shape: f32[1,128], index: 12, kind: input, shape index: {}]
  %s13 = inlined_call_operand.hbm [shape: f32[128,128], index: 13, kind: input, shape index: {}]
  %s14 = inlined_call_operand.vmem [shape: f32[1,128], index: 14, kind: input, shape index: {}]
  %s15 = inlined_call_operand.hbm [shape: f32[2,128], index: 15, kind: output, shape index: {}]
  %s16 = sld [smem:[#allocation0]]
  $region110: #{forward.1} parent=0
    _
  %s18 = ssub.s32 1, %s16
  %s19 = scalar_select 0, %s18, %s16
  $region1: #{forward.1} parent=0
    #allocation3 [shape = 'u8[131072]{0}', space=vmem, size = 0x20000, scoped, tag = 'input window, operand 1, single buffered']
    #allocation4 [shape = 's32[1]{0}', space=sflag, size = 0x4, scoped, tag = 'scoped memory for forward.1']
    #allocation5 [shape = 's32[1]{0}', space=sflag, size = 0x4, scoped, tag = 'scoped memory for forward.1']
    #allocation6 [shape = 'u8[131072]{0}', space=vmem, size = 0x20000, scoped, tag = 'input window, operand 3, single buffered']
    #allocation7 [shape = 's32[1]{0}', space=sflag, size = 0x4, scoped, tag = 'scoped memory for forward.1']
    #allocation8 [shape = 'u8[65536]{0}', space=vmem, size = 0x10000, scoped, tag = 'input window, operand 5, single buffered']
    #allocation9 [shape = 'u8[512]{0}', space=vmem, size = 0x400, scoped, tag = 'input window, operand 6, single buffered']
    #allocation10 [shape = 's32[1]{0}', space=sflag, size = 0x4, scoped, tag = 'scoped memory for forward.1']
    #allocation11 [shape = 'u8[131072]{0}', space=vmem, size = 0x20000, scoped, tag = 'input window, operand 7, single buffered']
    #allocation12 [shape = 'u8[512]{0}', space=vmem, size = 0x400, scoped, tag = 'input window, operand 8, single buffered']
    #allocation13 [shape = 's32[1]{0}', space=sflag, size = 0x4, scoped, tag = 'scoped memory for forward.1']
    #allocation14 [shape = 'u8[131072]{0}', space=vmem, size = 0x20000, scoped, tag = 'input window, operand 9, single buffered']
    #allocation15 [shape = 'u8[512]{0}', space=vmem, size = 0x400, scoped, tag = 'input window, operand 10, single buffered']
    #allocation16 [shape = 's32[1]{0}', space=sflag, size = 0x4, scoped, tag = 'scoped memory for forward.1']
    #allocation17 [shape = 'u8[512]{0}', space=vmem, size = 0x400, scoped, tag = 'input window, operand 12, single buffered']
    #allocation18 [shape = 'u8[65536]{0}', space=vmem, size = 0x10000, scoped, tag = 'input window, operand 13, single buffered']
    #allocation19 [shape = 's32[1]{0}', space=sflag, size = 0x4, scoped, tag = 'scoped memory for forward.1']
    #allocation20 [shape = 'u8[1024]{0}', space=vmem, size = 0x400, scoped, tag = 'output window, operand 0, single buffered']
    %20 = vsyncpa [#allocation4], 0
    %21 = vsyncpa [#allocation7], 0
    %22 = vsyncpa [#allocation10], 0
    %23 = vsyncpa [#allocation13], 0
    %24 = vsyncpa [#allocation16], 0
    %25 = vsyncpa [#allocation19], 0
    %26 = vsyncpa [#allocation5], 0
    // Predicated region
    $region2: #{forward.1} parent=1 // pred_check
      _
    $region3: #{forward.1} parent=1 // pred_check_branch
      %28 = sbr.rel (0) target = $region5
    $region4: #{forward.1} parent=1 // pred_region
      _
    $region5: #{forward.1} parent=1 // pred_fallthru
      _
    // Predicated region
    $region6: #{forward.1} parent=1 // pred_check
      _
    $region7: #{forward.1} parent=1 // pred_check_branch
      %30 = sbr.rel (0) target = $region9
    $region8: #{forward.1} parent=1 // pred_region
      %s32 = ssub.s32 4096, 4096
      %33 = vsyncadd [#allocation4], %s32
      %s34 = sshll.u32 [#allocation3], 4
      %s35 = int_to_ptr.vmem [resolvable:$true] %s34
      %40 = dma.hbm_to_vmem [thread:$0]  %s1, 4096, %s35, [#allocation4], 128, 128, 8
    $region9: #{forward.1} parent=1 // pred_fallthru
      _
    // Predicated region
    $region10: #{forward.1} parent=1 // pred_check
      _
    $region11: #{forward.1} parent=1 // pred_check_branch
      %42 = sbr.rel (0) target = $region13
    $region12: #{forward.1} parent=1 // pred_region
      _
    $region13: #{forward.1} parent=1 // pred_fallthru
      _
    // Predicated region
    $region14: #{forward.1} parent=1 // pred_check
      _
    $region15: #{forward.1} parent=1 // pred_check_branch
      %44 = sbr.rel (0) target = $region17
    $region16: #{forward.1} parent=1 // pred_region
      %s46 = ssub.s32 4096, 4096
      %47 = vsyncadd [#allocation7], %s46
      %s48 = sshll.u32 [#allocation6], 4
      %s49 = int_to_ptr.vmem [resolvable:$true] %s48
      %54 = dma.hbm_to_vmem [thread:$0]  %s3, 4096, %s49, [#allocation7], 128, 128, 8
    $region17: #{forward.1} parent=1 // pred_fallthru
      _
    // Predicated region
    $region18: #{forward.1} parent=1 // pred_check
      _
    $region19: #{forward.1} parent=1 // pred_check_branch
      %56 = sbr.rel (0) target = $region21
    $region20: #{forward.1} parent=1 // pred_region
      _
    $region21: #{forward.1} parent=1 // pred_fallthru
      _
    // Predicated region
    $region22: #{forward.1} parent=1 // pred_check
      _
    $region23: #{forward.1} parent=1 // pred_check_branch
      %58 = sbr.rel (0) target = $region25
    $region24: #{forward.1} parent=1 // pred_region
      %s60 = ssub.s32 2048, 2048
      %61 = vsyncadd [#allocation7], %s60
      %s62 = sshll.u32 [#allocation8], 4
      %s63 = int_to_ptr.vmem [resolvable:$true] %s62
      %68 = dma.hbm_to_vmem [thread:$0]  %s5, 2048, %s63, [#allocation7], 128, 128, 8
    $region25: #{forward.1} parent=1 // pred_fallthru
      _
    // Predicated region
    $region26: #{forward.1} parent=1 // pred_check
      _
    $region27: #{forward.1} parent=1 // pred_check_branch
      %70 = sbr.rel (0) target = $region29
    $region28: #{forward.1} parent=1 // pred_region
      %s72 = ssub.s32 16, 16
      %73 = vsyncadd [#allocation10], %s72
      %s75 = sshll.u32 [#allocation9], 4
      %s76 = int_to_ptr.vmem [resolvable:$true] %s75
      %78 = dma.hbm_to_vmem [thread:$0]  %s6, 16, %s76, [#allocation10]
    $region29: #{forward.1} parent=1 // pred_fallthru
      _
    // Predicated region
    $region30: #{forward.1} parent=1 // pred_check
      _
    $region31: #{forward.1} parent=1 // pred_check_branch
      %80 = sbr.rel (0) target = $region33
    $region32: #{forward.1} parent=1 // pred_region
      %s82 = ssub.s32 4096, 4096
      %83 = vsyncadd [#allocation10], %s82
      %s84 = sshll.u32 [#allocation11], 4
      %s85 = int_to_ptr.vmem [resolvable:$true] %s84
      %90 = dma.hbm_to_vmem [thread:$0]  %s7, 4096, %s85, [#allocation10], 128, 128, 8
    $region33: #{forward.1} parent=1 // pred_fallthru
      _
    // Predicated region
    $region34: #{forward.1} parent=1 // pred_check
      _
    $region35: #{forward.1} parent=1 // pred_check_branch
      %92 = sbr.rel (0) target = $region37
    $region36: #{forward.1} parent=1 // pred_region
      %s94 = ssub.s32 16, 16
      %95 = vsyncadd [#allocation13], %s94
      %s97 = sshll.u32 [#allocation12], 4
      %s98 = int_to_ptr.vmem [resolvable:$true] %s97
      %100 = dma.hbm_to_vmem [thread:$0]  %s8, 16, %s98, [#allocation13]
    $region37: #{forward.1} parent=1 // pred_fallthru
      _
    // Predicated region
    $region38: #{forward.1} parent=1 // pred_check
      _
    $region39: #{forward.1} parent=1 // pred_check_branch
      %102 = sbr.rel (0) target = $region41
    $region40: #{forward.1} parent=1 // pred_region
      %s104 = ssub.s32 4096, 4096
      %105 = vsyncadd [#allocation13], %s104
      %s106 = sshll.u32 [#allocation14], 4
      %s107 = int_to_ptr.vmem [resolvable:$true] %s106
      %112 = dma.hbm_to_vmem [thread:$0]  %s9, 4096, %s107, [#allocation13], 128, 128, 8
    $region41: #{forward.1} parent=1 // pred_fallthru
      _
    // Predicated region
    $region42: #{forward.1} parent=1 // pred_check
      _
    $region43: #{forward.1} parent=1 // pred_check_branch
      %114 = sbr.rel (0) target = $region45
    $region44: #{forward.1} parent=1 // pred_region
      %s116 = ssub.s32 16, 16
      %117 = vsyncadd [#allocation16], %s116
      %s119 = sshll.u32 [#allocation15], 4
      %s120 = int_to_ptr.vmem [resolvable:$true] %s119
      %122 = dma.hbm_to_vmem [thread:$0]  %s10, 16, %s120, [#allocation16]
    $region45: #{forward.1} parent=1 // pred_fallthru
      _
    // Predicated region
    $region46: #{forward.1} parent=1 // pred_check
      _
    $region47: #{forward.1} parent=1 // pred_check_branch
      %124 = sbr.rel (0) target = $region49
    $region48: #{forward.1} parent=1 // pred_region
      _
    $region49: #{forward.1} parent=1 // pred_fallthru
      _
    // Predicated region
    $region50: #{forward.1} parent=1 // pred_check
      _
    $region51: #{forward.1} parent=1 // pred_check_branch
      %126 = sbr.rel (0) target = $region53
    $region52: #{forward.1} parent=1 // pred_region
      %s128 = ssub.s32 16, 16
      %129 = vsyncadd [#allocation16], %s128
      %s131 = sshll.u32 [#allocation17], 4
      %s132 = int_to_ptr.vmem [resolvable:$true] %s131
      %134 = dma.hbm_to_vmem [thread:$0]  %s12, 16, %s132, [#allocation16]
    $region53: #{forward.1} parent=1 // pred_fallthru
      _
    // Predicated region
    $region54: #{forward.1} parent=1 // pred_check
      _
    $region55: #{forward.1} parent=1 // pred_check_branch
      %136 = sbr.rel (0) target = $region57
    $region56: #{forward.1} parent=1 // pred_region
      %s138 = ssub.s32 2048, 2048
      %139 = vsyncadd [#allocation19], %s138
      %s140 = sshll.u32 [#allocation18], 4
      %s141 = int_to_ptr.vmem [resolvable:$true] %s140
      %146 = dma.hbm_to_vmem [thread:$0]  %s13, 2048, %s141, [#allocation19], 128, 128, 8
    $region57: #{forward.1} parent=1 // pred_fallthru
      _
    // Predicated region
    $region58: #{forward.1} parent=1 // pred_check
      _
    $region59: #{forward.1} parent=1 // pred_check_branch
      %148 = sbr.rel (0) target = $region61
    $region60: #{forward.1} parent=1 // pred_region
      _
    $region61: #{forward.1} parent=1 // pred_fallthru
      _
    // Predicated region
    $region62: #{forward.1} parent=1 // pred_check
      _
    $region63: #{forward.1} parent=1 // pred_check_branch
      %150 = sbr.rel (0) target = $region65
    $region64: #{forward.1} parent=1 // pred_region
      %151 = dma.done [#allocation4], 4096
    $region65: #{forward.1} parent=1 // pred_fallthru
      _
    // Predicated region
    $region66: #{forward.1} parent=1 // pred_check
      _
    $region67: #{forward.1} parent=1 // pred_check_branch
      %153 = sbr.rel (0) target = $region69
    $region68: #{forward.1} parent=1 // pred_region
      %154 = dma.done [#allocation7], 4096
    $region69: #{forward.1} parent=1 // pred_fallthru
      _
    // Predicated region
    $region70: #{forward.1} parent=1 // pred_check
      _
    $region71: #{forward.1} parent=1 // pred_check_branch
      %156 = sbr.rel (0) target = $region73
    $region72: #{forward.1} parent=1 // pred_region
      %157 = dma.done [#allocation7], 2048
    $region73: #{forward.1} parent=1 // pred_fallthru
      _
    // Predicated region
    $region74: #{forward.1} parent=1 // pred_check
      _
    $region75: #{forward.1} parent=1 // pred_check_branch
      %159 = sbr.rel (0) target = $region77
    $region76: #{forward.1} parent=1 // pred_region
      %160 = dma.done [#allocation10], 16
    $region77: #{forward.1} parent=1 // pred_fallthru
      _
    // Predicated region
    $region78: #{forward.1} parent=1 // pred_check
      _
    $region79: #{forward.1} parent=1 // pred_check_branch
      %162 = sbr.rel (0) target = $region81
    $region80: #{forward.1} parent=1 // pred_region
      %163 = dma.done [#allocation10], 4096
    $region81: #{forward.1} parent=1 // pred_fallthru
      _
    // Predicated region
    $region82: #{forward.1} parent=1 // pred_check
      _
    $region83: #{forward.1} parent=1 // pred_check_branch
      %165 = sbr.rel (0) target = $region85
    $region84: #{forward.1} parent=1 // pred_region
      %166 = dma.done [#allocation13], 16
    $region85: #{forward.1} parent=1 // pred_fallthru
      _
    // Predicated region
    $region86: #{forward.1} parent=1 // pred_check
      _
    $region87: #{forward.1} parent=1 // pred_check_branch
      %168 = sbr.rel (0) target = $region89
    $region88: #{forward.1} parent=1 // pred_region
      %169 = dma.done [#allocation13], 4096
    $region89: #{forward.1} parent=1 // pred_fallthru
      _
    // Predicated region
    $region90: #{forward.1} parent=1 // pred_check
      _
    $region91: #{forward.1} parent=1 // pred_check_branch
      %171 = sbr.rel (0) target = $region93
    $region92: #{forward.1} parent=1 // pred_region
      %172 = dma.done [#allocation16], 16
    $region93: #{forward.1} parent=1 // pred_fallthru
      _
    // Predicated region
    $region94: #{forward.1} parent=1 // pred_check
      _
    $region95: #{forward.1} parent=1 // pred_check_branch
      %174 = sbr.rel (0) target = $region97
    $region96: #{forward.1} parent=1 // pred_region
      %175 = dma.done [#allocation16], 16
    $region97: #{forward.1} parent=1 // pred_fallthru
      _
    // Predicated region
    $region98: #{forward.1} parent=1 // pred_check
      _
    $region99: #{forward.1} parent=1 // pred_check_branch
      %177 = sbr.rel (0) target = $region101
    $region100: #{forward.1} parent=1 // pred_region
      %178 = dma.done [#allocation19], 2048
    $region101: #{forward.1} parent=1 // pred_fallthru
      _
    %179 = vst [vmem:[#allocation2] sm:$0xff] 0.0
    %180 = vst [vmem:[#allocation2 + $0x18] sm:$0xff] 0.0
    %v181 = vld [vmem:[%s0] sm:$0xff]
    %v182 = vld [vmem:[%s0 + $0x8] sm:$0xff]
    %v183 = vld [vmem:[%s0 + $0x10] sm:$0xff]
    %v184 = vld [vmem:[%s0 + $0x18] sm:$0xff]
    %185 = vst [vmem:[#allocation2 + $0x8] sm:$0xff] %v181
    %186 = vst [vmem:[#allocation2 + $0x10] sm:$0xff] %v182
    %187 = vst [vmem:[#allocation2 + $0x20] sm:$0xff] %v183
    %188 = vst [vmem:[#allocation2 + $0x28] sm:$0xff] %v184
    %v189 = vld [vmem:[#allocation2 + $0x8] sm:$0xff]
    %v190 = vld [vmem:[#allocation2 + $0x10] sm:$0xff]
    %v191 = vld [vmem:[#allocation2 + $0x20] sm:$0xff]
    %v192 = vld [vmem:[#allocation2 + $0x28] sm:$0xff]
    %v193 = vld [vmem:[#allocation2 + $0x7] sm:$0xff]
    %v194 = vld [vmem:[#allocation2 + $0xf] sm:$0xff]
    %v195 = vld [vmem:[#allocation2 + $0x1f] sm:$0xff]
    %v196 = vld [vmem:[#allocation2 + $0x27] sm:$0xff]
    %v197 = vld [vmem:[#allocation3] sm:$0xff]
    %v198 = vld [vmem:[#allocation3 + $0x8] sm:$0xff]
    %v199 = vld [vmem:[#allocation3 + $0x10] sm:$0xff]
    %v200 = vld [vmem:[#allocation3 + $0x18] sm:$0xff]
    %v201 = vld [vmem:[#allocation3 + $0x20] sm:$0xff]
    %v202 = vld [vmem:[#allocation3 + $0x28] sm:$0xff]
    %v203 = vld [vmem:[#allocation3 + $0x30] sm:$0xff]
    %v204 = vld [vmem:[#allocation3 + $0x38] sm:$0xff]
    %v205 = vld [vmem:[#allocation3 + $0x40] sm:$0xff]
    %v206 = vld [vmem:[#allocation3 + $0x48] sm:$0xff]
    %v207 = vld [vmem:[#allocation3 + $0x50] sm:$0xff]
    %v208 = vld [vmem:[#allocation3 + $0x58] sm:$0xff]
    %v209 = vld [vmem:[#allocation3 + $0x60] sm:$0xff]
    %v210 = vld [vmem:[#allocation3 + $0x68] sm:$0xff]
    %v211 = vld [vmem:[#allocation3 + $0x70] sm:$0xff]
    %v212 = vld [vmem:[#allocation3 + $0x78] sm:$0xff]
    %s213 = scalar_lea.vmem [#allocation3], 128
    %v214 = vld [vmem:[%s213] sm:$0xff]
    %v215 = vld [vmem:[%s213 + $0x8] sm:$0xff]
    %v216 = vld [vmem:[%s213 + $0x10] sm:$0xff]
    %v217 = vld [vmem:[%s213 + $0x18] sm:$0xff]
    %v218 = vld [vmem:[%s213 + $0x20] sm:$0xff]
    %v219 = vld [vmem:[%s213 + $0x28] sm:$0xff]
    %v220 = vld [vmem:[%s213 + $0x30] sm:$0xff]
    %v221 = vld [vmem:[%s213 + $0x38] sm:$0xff]
    %v222 = vld [vmem:[%s213 + $0x40] sm:$0xff]
    %v223 = vld [vmem:[%s213 + $0x48] sm:$0xff]
    %v224 = vld [vmem:[%s213 + $0x50] sm:$0xff]
    %v225 = vld [vmem:[%s213 + $0x58] sm:$0xff]
    %v226 = vld [vmem:[%s213 + $0x60] sm:$0xff]
    %v227 = vld [vmem:[%s213 + $0x68] sm:$0xff]
    %v228 = vld [vmem:[%s213 + $0x70] sm:$0xff]
    %v229 = vld [vmem:[%s213 + $0x78] sm:$0xff]
    %230 = vmatprep.subr.mxu0 0.0
    %231 = vmatpush1.msra.mxu0 %v229
    %232 = vmatprep.subr.mxu0 0.0
    %233 = vmatpush1.msra.mxu0 %v228
    %234 = vmatprep.subr.mxu0 0.0
    %235 = vmatpush1.msra.mxu0 %v227
    %236 = vmatprep.subr.mxu0 0.0
    %237 = vmatpush1.msra.mxu0 %v226
    %238 = vmatprep.subr.mxu0 0.0
    %239 = vmatpush1.msra.mxu0 %v225
    %240 = vmatprep.subr.mxu0 0.0
    %241 = vmatpush1.msra.mxu0 %v224
    %242 = vmatprep.subr.mxu0 0.0
    %243 = vmatpush1.msra.mxu0 %v223
    %244 = vmatprep.subr.mxu0 0.0
    %245 = vmatpush1.msra.mxu0 %v222
    %246 = vmatprep.subr.mxu0 0.0
    %247 = vmatpush1.msra.mxu0 %v221
    %248 = vmatprep.subr.mxu0 0.0
    %249 = vmatpush1.msra.mxu0 %v220
    %250 = vmatprep.subr.mxu0 0.0
    %251 = vmatpush1.msra.mxu0 %v219
    %252 = vmatprep.subr.mxu0 0.0
    %253 = vmatpush1.msra.mxu0 %v218
    %254 = vmatprep.subr.mxu0 0.0
    %255 = vmatpush1.msra.mxu0 %v217
    %256 = vmatprep.subr.mxu0 0.0
    %257 = vmatpush1.msra.mxu0 %v216
    %258 = vmatprep.subr.mxu0 0.0
    %259 = vmatpush1.msra.mxu0 %v215
    %260 = vmatprep.subr.mxu0 0.0
    %261 = vmatpush1.msra.mxu0 %v214
    %262 = vmatprep.subr.mxu0 0.0
    %263 = vmatpush2.msra.mxu0 0.0
    %264 = vmatprep.subr.mxu0 0.0
    %265 = vmatpush2.msra.mxu0 0.0
    %266 = vmatprep.subr.mxu0 0.0
    %267 = vmatpush2.msra.mxu0 0.0
    %268 = vmatprep.subr.mxu0 0.0
    %269 = vmatpush2.msra.mxu0 0.0
    %270 = vmatprep.subr.mxu0 0.0
    %271 = vmatpush2.msra.mxu0 0.0
    %272 = vmatprep.subr.mxu0 0.0
    %273 = vmatpush2.msra.mxu0 0.0
    %274 = vmatprep.subr.mxu0 0.0
    %275 = vmatpush2.msra.mxu0 0.0
    %276 = vmatprep.subr.mxu0 0.0
    %277 = vmatpush2.msra.mxu0 0.0
    %278 = vmatprep.subr.mxu0 0.0
    %279 = vmatpush2.msra.mxu0 0.0
    %280 = vmatprep.subr.mxu0 0.0
    %281 = vmatpush2.msra.mxu0 0.0
    %282 = vmatprep.subr.mxu0 0.0
    %283 = vmatpush2.msra.mxu0 0.0
    %284 = vmatprep.subr.mxu0 0.0
    %285 = vmatpush2.msra.mxu0 0.0
    %286 = vmatprep.subr.mxu0 0.0
    %287 = vmatpush2.msra.mxu0 0.0
    %288 = vmatprep.subr.mxu0 0.0
    %289 = vmatpush2.msra.mxu0 0.0
    %290 = vmatprep.subr.mxu0 0.0
    %291 = vmatpush2.msra.mxu0 0.0
    %292 = vmatprep.subr.mxu0 0.0
    %293 = vmatpush2.msra.mxu0 0.0
    %294 = vmatprep.mubr.f32.mxu0 0.0
    %295 = vmatmul.mubr.f32.gmra.mxu0 %v189
    %v296 = vpop.f32.mrf.mxu0
    %v297 = vadd.f32 0.0, %v296
    %v298 = vpop.f32.mrf.mxu0
    %299 = vmatprep.mubr.f32.mxu0 0.0
    %300 = vmatmul.mubr.f32.gmra.mxu0 %v190
    %v301 = vpop.f32.mrf.mxu0
    %v302 = vadd.f32 0.0, %v301
    %v303 = vpop.f32.mrf.mxu0
    %304 = vmatprep.mubr.f32.mxu0 0.0
    %305 = vmatmul.mubr.f32.gmra.mxu0 %v191
    %v306 = vpop.f32.mrf.mxu0
    %v307 = vadd.f32 0.0, %v306
    %v308 = vpop.f32.mrf.mxu0
    %309 = vmatprep.mubr.f32.mxu0 0.0
    %310 = vmatmul.mubr.f32.gmra.mxu0 %v192
    %v311 = vpop.f32.mrf.mxu0
    %v312 = vadd.f32 0.0, %v311
    %v313 = vpop.f32.mrf.mxu0
    %314 = vdwg.mxu0
    %315 = vmatprep.subr.mxu0 0.0
    %316 = vmatpush1.msra.mxu0 %v212
    %317 = vmatprep.subr.mxu0 0.0
    %318 = vmatpush1.msra.mxu0 %v211
    %319 = vmatprep.subr.mxu0 0.0
    %320 = vmatpush1.msra.mxu0 %v210
    %321 = vmatprep.subr.mxu0 0.0
    %322 = vmatpush1.msra.mxu0 %v209
    %323 = vmatprep.subr.mxu0 0.0
    %324 = vmatpush1.msra.mxu0 %v208
    %325 = vmatprep.subr.mxu0 0.0
    %326 = vmatpush1.msra.mxu0 %v207
    %327 = vmatprep.subr.mxu0 0.0
    %328 = vmatpush1.msra.mxu0 %v206
    %329 = vmatprep.subr.mxu0 0.0
    %330 = vmatpush1.msra.mxu0 %v205
    %331 = vmatprep.subr.mxu0 0.0
    %332 = vmatpush1.msra.mxu0 %v204
    %333 = vmatprep.subr.mxu0 0.0
    %334 = vmatpush1.msra.mxu0 %v203
    %335 = vmatprep.subr.mxu0 0.0
    %336 = vmatpush1.msra.mxu0 %v202
    %337 = vmatprep.subr.mxu0 0.0
    %338 = vmatpush1.msra.mxu0 %v201
    %339 = vmatprep.subr.mxu0 0.0
    %340 = vmatpush1.msra.mxu0 %v200
    %341 = vmatprep.subr.mxu0 0.0
    %342 = vmatpush1.msra.mxu0 %v199
    %343 = vmatprep.subr.mxu0 0.0
    %344 = vmatpush1.msra.mxu0 %v198
    %345 = vmatprep.subr.mxu0 0.0
    %346 = vmatpush1.msra.mxu0 %v197
    %347 = vmatprep.subr.mxu0 0.0
    %348 = vmatpush2.msra.mxu0 0.0
    %349 = vmatprep.subr.mxu0 0.0
    %350 = vmatpush2.msra.mxu0 0.0
    %351 = vmatprep.subr.mxu0 0.0
    %352 = vmatpush2.msra.mxu0 0.0
    %353 = vmatprep.subr.mxu0 0.0
    %354 = vmatpush2.msra.mxu0 0.0
    %355 = vmatprep.subr.mxu0 0.0
    %356 = vmatpush2.msra.mxu0 0.0
    %357 = vmatprep.subr.mxu0 0.0
    %358 = vmatpush2.msra.mxu0 0.0
    %359 = vmatprep.subr.mxu0 0.0
    %360 = vmatpush2.msra.mxu0 0.0
    %361 = vmatprep.subr.mxu0 0.0
    %362 = vmatpush2.msra.mxu0 0.0
    %363 = vmatprep.subr.mxu0 0.0
    %364 = vmatpush2.msra.mxu0 0.0
    %365 = vmatprep.subr.mxu0 0.0
    %366 = vmatpush2.msra.mxu0 0.0
    %367 = vmatprep.subr.mxu0 0.0
    %368 = vmatpush2.msra.mxu0 0.0
    %369 = vmatprep.subr.mxu0 0.0
    %370 = vmatpush2.msra.mxu0 0.0
    %371 = vmatprep.subr.mxu0 0.0
    %372 = vmatpush2.msra.mxu0 0.0
    %373 = vmatprep.subr.mxu0 0.0
    %374 = vmatpush2.msra.mxu0 0.0
    %375 = vmatprep.subr.mxu0 0.0
    %376 = vmatpush2.msra.mxu0 0.0
    %377 = vmatprep.subr.mxu0 0.0
    %378 = vmatpush2.msra.mxu0 0.0
    %379 = vmatprep.mubr.f32.mxu0 0.0
    %380 = vmatmul.mubr.f32.gmra.mxu0 %v193
    %v381 = vpop.f32.mrf.mxu0
    %v382 = vadd.f32 %v297, %v381
    %v383 = vpop.f32.mrf.mxu0
    %384 = vmatprep.mubr.f32.mxu0 0.0
    %385 = vmatmul.mubr.f32.gmra.mxu0 %v194
    %v386 = vpop.f32.mrf.mxu0
    %v387 = vadd.f32 %v302, %v386
    %v388 = vpop.f32.mrf.mxu0
    %389 = vmatprep.mubr.f32.mxu0 0.0
    %390 = vmatmul.mubr.f32.gmra.mxu0 %v195
    %v391 = vpop.f32.mrf.mxu0
    %v392 = vadd.f32 %v307, %v391
    %v393 = vpop.f32.mrf.mxu0
    %394 = vmatprep.mubr.f32.mxu0 0.0
    %395 = vmatmul.mubr.f32.gmra.mxu0 %v196
    %v396 = vpop.f32.mrf.mxu0
    %v397 = vadd.f32 %v312, %v396
    %v398 = vpop.f32.mrf.mxu0
    %399 = vdwg.mxu0
    %v400 = vld [vmem:[%s2] sm:$0x1]
    %v402 = vlaneseq
    %v403 = vshrl.u32 %v402, 7
    %v404 = vsub.s32 0, %v403
    %v405 = vrot.slane %v400, %v404
    %v407 = vadd.f32 %v382, %v405
    %v408 = vadd.f32 %v387, %v405
    %v409 = vadd.f32 %v392, %v405
    %v410 = vadd.f32 %v397, %v405
    %v411 = vmax.f32 %v407, 0.0
    %v412 = vmax.f32 %v408, 0.0
    %v413 = vmax.f32 %v409, 0.0
    %v414 = vmax.f32 %v410, 0.0
    %415 = vst [vmem:[#allocation2 + $0x8] sm:$0xff] %v411
    %416 = vst [vmem:[#allocation2 + $0x10] sm:$0xff] %v412
    %417 = vst [vmem:[#allocation2 + $0x20] sm:$0xff] %v413
    %418 = vst [vmem:[#allocation2 + $0x28] sm:$0xff] %v414
    %v419 = vld [vmem:[#allocation2 + $0x7] sm:$0xff]
    %v420 = vld [vmem:[#allocation2 + $0xf] sm:$0xff]
    %v421 = vld [vmem:[#allocation2 + $0x1f] sm:$0xff]
    %v422 = vld [vmem:[#allocation2 + $0x27] sm:$0xff]
    %v423 = vld [vmem:[#allocation6] sm:$0xff]
    %v424 = vld [vmem:[#allocation6 + $0x8] sm:$0xff]
    %v425 = vld [vmem:[#allocation6 + $0x10] sm:$0xff]
    %v426 = vld [vmem:[#allocation6 + $0x18] sm:$0xff]
    %v427 = vld [vmem:[#allocation6 + $0x20] sm:$0xff]
    %v428 = vld [vmem:[#allocation6 + $0x28] sm:$0xff]
    %v429 = vld [vmem:[#allocation6 + $0x30] sm:$0xff]
    %v430 = vld [vmem:[#allocation6 + $0x38] sm:$0xff]
    %v431 = vld [vmem:[#allocation6 + $0x40] sm:$0xff]
    %v432 = vld [vmem:[#allocation6 + $0x48] sm:$0xff]
    %v433 = vld [vmem:[#allocation6 + $0x50] sm:$0xff]
    %v434 = vld [vmem:[#allocation6 + $0x58] sm:$0xff]
    %v435 = vld [vmem:[#allocation6 + $0x60] sm:$0xff]
    %v436 = vld [vmem:[#allocation6 + $0x68] sm:$0xff]
    %v437 = vld [vmem:[#allocation6 + $0x70] sm:$0xff]
    %v438 = vld [vmem:[#allocation6 + $0x78] sm:$0xff]
    %v439 = vld [vmem:[#allocation2 + $0x8] sm:$0xff]
    %v440 = vld [vmem:[#allocation2 + $0x10] sm:$0xff]
    %v441 = vld [vmem:[#allocation2 + $0x20] sm:$0xff]
    %v442 = vld [vmem:[#allocation2 + $0x28] sm:$0xff]
    %s443 = scalar_lea.vmem [#allocation6], 128
    %v444 = vld [vmem:[%s443] sm:$0xff]
    %v445 = vld [vmem:[%s443 + $0x8] sm:$0xff]
    %v446 = vld [vmem:[%s443 + $0x10] sm:$0xff]
    %v447 = vld [vmem:[%s443 + $0x18] sm:$0xff]
    %v448 = vld [vmem:[%s443 + $0x20] sm:$0xff]
    %v449 = vld [vmem:[%s443 + $0x28] sm:$0xff]
    %v450 = vld [vmem:[%s443 + $0x30] sm:$0xff]
    %v451 = vld [vmem:[%s443 + $0x38] sm:$0xff]
    %v452 = vld [vmem:[%s443 + $0x40] sm:$0xff]
    %v453 = vld [vmem:[%s443 + $0x48] sm:$0xff]
    %v454 = vld [vmem:[%s443 + $0x50] sm:$0xff]
    %v455 = vld [vmem:[%s443 + $0x58] sm:$0xff]
    %v456 = vld [vmem:[%s443 + $0x60] sm:$0xff]
    %v457 = vld [vmem:[%s443 + $0x68] sm:$0xff]
    %v458 = vld [vmem:[%s443 + $0x70] sm:$0xff]
    %v459 = vld [vmem:[%s443 + $0x78] sm:$0xff]
    %460 = vmatprep.subr.mxu0 0.0
    %461 = vmatpush1.msra.mxu0 %v459
    %462 = vmatprep.subr.mxu0 0.0
    %463 = vmatpush1.msra.mxu0 %v458
    %464 = vmatprep.subr.mxu0 0.0
    %465 = vmatpush1.msra.mxu0 %v457
    %466 = vmatprep.subr.mxu0 0.0
    %467 = vmatpush1.msra.mxu0 %v456
    %468 = vmatprep.subr.mxu0 0.0
    %469 = vmatpush1.msra.mxu0 %v455
    %470 = vmatprep.subr.mxu0 0.0
    %471 = vmatpush1.msra.mxu0 %v454
    %472 = vmatprep.subr.mxu0 0.0
    %473 = vmatpush1.msra.mxu0 %v453
    %474 = vmatprep.subr.mxu0 0.0
    %475 = vmatpush1.msra.mxu0 %v452
    %476 = vmatprep.subr.mxu0 0.0
    %477 = vmatpush1.msra.mxu0 %v451
    %478 = vmatprep.subr.mxu0 0.0
    %479 = vmatpush1.msra.mxu0 %v450
    %480 = vmatprep.subr.mxu0 0.0
    %481 = vmatpush1.msra.mxu0 %v449
    %482 = vmatprep.subr.mxu0 0.0
    %483 = vmatpush1.msra.mxu0 %v448
    %484 = vmatprep.subr.mxu0 0.0
    %485 = vmatpush1.msra.mxu0 %v447
    %486 = vmatprep.subr.mxu0 0.0
    %487 = vmatpush1.msra.mxu0 %v446
    %488 = vmatprep.subr.mxu0 0.0
    %489 = vmatpush1.msra.mxu0 %v445
    %490 = vmatprep.subr.mxu0 0.0
    %491 = vmatpush1.msra.mxu0 %v444
    %492 = vmatprep.subr.mxu0 0.0
    %493 = vmatpush2.msra.mxu0 0.0
    %494 = vmatprep.subr.mxu0 0.0
    %495 = vmatpush2.msra.mxu0 0.0
    %496 = vmatprep.subr.mxu0 0.0
    %497 = vmatpush2.msra.mxu0 0.0
    %498 = vmatprep.subr.mxu0 0.0
    %499 = vmatpush2.msra.mxu0 0.0
    %500 = vmatprep.subr.mxu0 0.0
    %501 = vmatpush2.msra.mxu0 0.0
    %502 = vmatprep.subr.mxu0 0.0
    %503 = vmatpush2.msra.mxu0 0.0
    %504 = vmatprep.subr.mxu0 0.0
    %505 = vmatpush2.msra.mxu0 0.0
    %506 = vmatprep.subr.mxu0 0.0
    %507 = vmatpush2.msra.mxu0 0.0
    %508 = vmatprep.subr.mxu0 0.0
    %509 = vmatpush2.msra.mxu0 0.0
    %510 = vmatprep.subr.mxu0 0.0
    %511 = vmatpush2.msra.mxu0 0.0
    %512 = vmatprep.subr.mxu0 0.0
    %513 = vmatpush2.msra.mxu0 0.0
    %514 = vmatprep.subr.mxu0 0.0
    %515 = vmatpush2.msra.mxu0 0.0
    %516 = vmatprep.subr.mxu0 0.0
    %517 = vmatpush2.msra.mxu0 0.0
    %518 = vmatprep.subr.mxu0 0.0
    %519 = vmatpush2.msra.mxu0 0.0
    %520 = vmatprep.subr.mxu0 0.0
    %521 = vmatpush2.msra.mxu0 0.0
    %522 = vmatprep.subr.mxu0 0.0
    %523 = vmatpush2.msra.mxu0 0.0
    %524 = vmatprep.mubr.f32.mxu0 0.0
    %525 = vmatmul.mubr.f32.gmra.mxu0 %v439
    %v526 = vpop.f32.mrf.mxu0
    %v527 = vadd.f32 0.0, %v526
    %v528 = vpop.f32.mrf.mxu0
    %529 = vmatprep.mubr.f32.mxu0 0.0
    %530 = vmatmul.mubr.f32.gmra.mxu0 %v440
    %v531 = vpop.f32.mrf.mxu0
    %v532 = vadd.f32 0.0, %v531
    %v533 = vpop.f32.mrf.mxu0
    %534 = vmatprep.mubr.f32.mxu0 0.0
    %535 = vmatmul.mubr.f32.gmra.mxu0 %v441
    %v536 = vpop.f32.mrf.mxu0
    %v537 = vadd.f32 0.0, %v536
    %v538 = vpop.f32.mrf.mxu0
    %539 = vmatprep.mubr.f32.mxu0 0.0
    %540 = vmatmul.mubr.f32.gmra.mxu0 %v442
    %v541 = vpop.f32.mrf.mxu0
    %v542 = vadd.f32 0.0, %v541
    %v543 = vpop.f32.mrf.mxu0
    %544 = vdwg.mxu0
    %545 = vmatprep.subr.mxu0 0.0
    %546 = vmatpush1.msra.mxu0 %v438
    %547 = vmatprep.subr.mxu0 0.0
    %548 = vmatpush1.msra.mxu0 %v437
    %549 = vmatprep.subr.mxu0 0.0
    %550 = vmatpush1.msra.mxu0 %v436
    %551 = vmatprep.subr.mxu0 0.0
    %552 = vmatpush1.msra.mxu0 %v435
    %553 = vmatprep.subr.mxu0 0.0
    %554 = vmatpush1.msra.mxu0 %v434
    %555 = vmatprep.subr.mxu0 0.0
    %556 = vmatpush1.msra.mxu0 %v433
    %557 = vmatprep.subr.mxu0 0.0
    %558 = vmatpush1.msra.mxu0 %v432
    %559 = vmatprep.subr.mxu0 0.0
    %560 = vmatpush1.msra.mxu0 %v431
    %561 = vmatprep.subr.mxu0 0.0
    %562 = vmatpush1.msra.mxu0 %v430
    %563 = vmatprep.subr.mxu0 0.0
    %564 = vmatpush1.msra.mxu0 %v429
    %565 = vmatprep.subr.mxu0 0.0
    %566 = vmatpush1.msra.mxu0 %v428
    %567 = vmatprep.subr.mxu0 0.0
    %568 = vmatpush1.msra.mxu0 %v427
    %569 = vmatprep.subr.mxu0 0.0
    %570 = vmatpush1.msra.mxu0 %v426
    %571 = vmatprep.subr.mxu0 0.0
    %572 = vmatpush1.msra.mxu0 %v425
    %573 = vmatprep.subr.mxu0 0.0
    %574 = vmatpush1.msra.mxu0 %v424
    %575 = vmatprep.subr.mxu0 0.0
    %576 = vmatpush1.msra.mxu0 %v423
    %577 = vmatprep.subr.mxu0 0.0
    %578 = vmatpush2.msra.mxu0 0.0
    %579 = vmatprep.subr.mxu0 0.0
    %580 = vmatpush2.msra.mxu0 0.0
    %581 = vmatprep.subr.mxu0 0.0
    %582 = vmatpush2.msra.mxu0 0.0
    %583 = vmatprep.subr.mxu0 0.0
    %584 = vmatpush2.msra.mxu0 0.0
    %585 = vmatprep.subr.mxu0 0.0
    %586 = vmatpush2.msra.mxu0 0.0
    %587 = vmatprep.subr.mxu0 0.0
    %588 = vmatpush2.msra.mxu0 0.0
    %589 = vmatprep.subr.mxu0 0.0
    %590 = vmatpush2.msra.mxu0 0.0
    %591 = vmatprep.subr.mxu0 0.0
    %592 = vmatpush2.msra.mxu0 0.0
    %593 = vmatprep.subr.mxu0 0.0
    %594 = vmatpush2.msra.mxu0 0.0
    %595 = vmatprep.subr.mxu0 0.0
    %596 = vmatpush2.msra.mxu0 0.0
    %597 = vmatprep.subr.mxu0 0.0
    %598 = vmatpush2.msra.mxu0 0.0
    %599 = vmatprep.subr.mxu0 0.0
    %600 = vmatpush2.msra.mxu0 0.0
    %601 = vmatprep.subr.mxu0 0.0
    %602 = vmatpush2.msra.mxu0 0.0
    %603 = vmatprep.subr.mxu0 0.0
    %604 = vmatpush2.msra.mxu0 0.0
    %605 = vmatprep.subr.mxu0 0.0
    %606 = vmatpush2.msra.mxu0 0.0
    %607 = vmatprep.subr.mxu0 0.0
    %608 = vmatpush2.msra.mxu0 0.0
    %609 = vmatprep.mubr.f32.mxu0 0.0
    %610 = vmatmul.mubr.f32.gmra.mxu0 %v419
    %v611 = vpop.f32.mrf.mxu0
    %v612 = vadd.f32 %v527, %v611
    %v613 = vpop.f32.mrf.mxu0
    %614 = vmatprep.mubr.f32.mxu0 0.0
    %615 = vmatmul.mubr.f32.gmra.mxu0 %v420
    %v616 = vpop.f32.mrf.mxu0
    %v617 = vadd.f32 %v532, %v616
    %v618 = vpop.f32.mrf.mxu0
    %619 = vmatprep.mubr.f32.mxu0 0.0
    %620 = vmatmul.mubr.f32.gmra.mxu0 %v421
    %v621 = vpop.f32.mrf.mxu0
    %v622 = vadd.f32 %v537, %v621
    %v623 = vpop.f32.mrf.mxu0
    %624 = vmatprep.mubr.f32.mxu0 0.0
    %625 = vmatmul.mubr.f32.gmra.mxu0 %v422
    %v626 = vpop.f32.mrf.mxu0
    %v627 = vadd.f32 %v542, %v626
    %v628 = vpop.f32.mrf.mxu0
    %629 = vdwg.mxu0
    %v630 = vld [vmem:[%s4] sm:$0x1]
    %v632 = vlaneseq
    %v633 = vshrl.u32 %v632, 7
    %v634 = vsub.s32 0, %v633
    %v635 = vrot.slane %v630, %v634
    %v637 = vadd.f32 %v612, %v635
    %v638 = vadd.f32 %v617, %v635
    %v639 = vadd.f32 %v622, %v635
    %v640 = vadd.f32 %v627, %v635
    %v641 = vmax.f32 %v637, 0.0
    %v642 = vmax.f32 %v638, 0.0
    %v643 = vmax.f32 %v639, 0.0
    %v644 = vmax.f32 %v640, 0.0
    %v645 = vld [vmem:[#allocation8] sm:$0xff]
    %v646 = vld [vmem:[#allocation8 + $0x8] sm:$0xff]
    %v647 = vld [vmem:[#allocation8 + $0x10] sm:$0xff]
    %v648 = vld [vmem:[#allocation8 + $0x18] sm:$0xff]
    %v649 = vld [vmem:[#allocation8 + $0x20] sm:$0xff]
    %v650 = vld [vmem:[#allocation8 + $0x28] sm:$0xff]
    %v651 = vld [vmem:[#allocation8 + $0x30] sm:$0xff]
    %v652 = vld [vmem:[#allocation8 + $0x38] sm:$0xff]
    %v653 = vld [vmem:[#allocation8 + $0x40] sm:$0xff]
    %v654 = vld [vmem:[#allocation8 + $0x48] sm:$0xff]
    %v655 = vld [vmem:[#allocation8 + $0x50] sm:$0xff]
    %v656 = vld [vmem:[#allocation8 + $0x58] sm:$0xff]
    %v657 = vld [vmem:[#allocation8 + $0x60] sm:$0xff]
    %v658 = vld [vmem:[#allocation8 + $0x68] sm:$0xff]
    %v659 = vld [vmem:[#allocation8 + $0x70] sm:$0xff]
    %v660 = vld [vmem:[#allocation8 + $0x78] sm:$0xff]
    %v661 = vld [vmem:[#allocation9] sm:$0x1]
    %v663 = vlaneseq
    %v664 = vshrl.u32 %v663, 7
    %v665 = vsub.s32 0, %v664
    %v666 = vrot.slane %v661, %v665
    %668 = vmatprep.subr.mxu0 0.0
    %669 = vmatpush1.msra.mxu0 %v660
    %670 = vmatprep.subr.mxu0 0.0
    %671 = vmatpush1.msra.mxu0 %v659
    %672 = vmatprep.subr.mxu0 0.0
    %673 = vmatpush1.msra.mxu0 %v658
    %674 = vmatprep.subr.mxu0 0.0
    %675 = vmatpush1.msra.mxu0 %v657
    %676 = vmatprep.subr.mxu0 0.0
    %677 = vmatpush1.msra.mxu0 %v656
    %678 = vmatprep.subr.mxu0 0.0
    %679 = vmatpush1.msra.mxu0 %v655
    %680 = vmatprep.subr.mxu0 0.0
    %681 = vmatpush1.msra.mxu0 %v654
    %682 = vmatprep.subr.mxu0 0.0
    %683 = vmatpush1.msra.mxu0 %v653
    %684 = vmatprep.subr.mxu0 0.0
    %685 = vmatpush1.msra.mxu0 %v652
    %686 = vmatprep.subr.mxu0 0.0
    %687 = vmatpush1.msra.mxu0 %v651
    %688 = vmatprep.subr.mxu0 0.0
    %689 = vmatpush1.msra.mxu0 %v650
    %690 = vmatprep.subr.mxu0 0.0
    %691 = vmatpush1.msra.mxu0 %v649
    %692 = vmatprep.subr.mxu0 0.0
    %693 = vmatpush1.msra.mxu0 %v648
    %694 = vmatprep.subr.mxu0 0.0
    %695 = vmatpush1.msra.mxu0 %v647
    %696 = vmatprep.subr.mxu0 0.0
    %697 = vmatpush1.msra.mxu0 %v646
    %698 = vmatprep.subr.mxu0 0.0
    %699 = vmatpush1.msra.mxu0 %v645
    %700 = vmatprep.subr.mxu0 0.0
    %701 = vmatpush2.msra.mxu0 0.0
    %702 = vmatprep.subr.mxu0 0.0
    %703 = vmatpush2.msra.mxu0 0.0
    %704 = vmatprep.subr.mxu0 0.0
    %705 = vmatpush2.msra.mxu0 0.0
    %706 = vmatprep.subr.mxu0 0.0
    %707 = vmatpush2.msra.mxu0 0.0
    %708 = vmatprep.subr.mxu0 0.0
    %709 = vmatpush2.msra.mxu0 0.0
    %710 = vmatprep.subr.mxu0 0.0
    %711 = vmatpush2.msra.mxu0 0.0
    %712 = vmatprep.subr.mxu0 0.0
    %713 = vmatpush2.msra.mxu0 0.0
    %714 = vmatprep.subr.mxu0 0.0
    %715 = vmatpush2.msra.mxu0 0.0
    %716 = vmatprep.subr.mxu0 0.0
    %717 = vmatpush2.msra.mxu0 0.0
    %718 = vmatprep.subr.mxu0 0.0
    %719 = vmatpush2.msra.mxu0 0.0
    %720 = vmatprep.subr.mxu0 0.0
    %721 = vmatpush2.msra.mxu0 0.0
    %722 = vmatprep.subr.mxu0 0.0
    %723 = vmatpush2.msra.mxu0 0.0
    %724 = vmatprep.subr.mxu0 0.0
    %725 = vmatpush2.msra.mxu0 0.0
    %726 = vmatprep.subr.mxu0 0.0
    %727 = vmatpush2.msra.mxu0 0.0
    %728 = vmatprep.subr.mxu0 0.0
    %729 = vmatpush2.msra.mxu0 0.0
    %730 = vmatprep.subr.mxu0 0.0
    %731 = vmatpush2.msra.mxu0 0.0
    %732 = vmatprep.mubr.f32.mxu0 0.0
    %733 = vmatmul.mubr.f32.gmra.mxu0 %v189
    %v734 = vpop.f32.mrf.mxu0
    %v735 = vadd.f32 %v666, %v734
    %v736 = vpop.f32.mrf.mxu0
    %737 = vmatprep.mubr.f32.mxu0 0.0
    %738 = vmatmul.mubr.f32.gmra.mxu0 %v190
    %v739 = vpop.f32.mrf.mxu0
    %v740 = vadd.f32 %v666, %v739
    %v741 = vpop.f32.mrf.mxu0
    %742 = vmatprep.mubr.f32.mxu0 0.0
    %743 = vmatmul.mubr.f32.gmra.mxu0 %v191
    %v744 = vpop.f32.mrf.mxu0
    %v745 = vadd.f32 %v666, %v744
    %v746 = vpop.f32.mrf.mxu0
    %747 = vmatprep.mubr.f32.mxu0 0.0
    %748 = vmatmul.mubr.f32.gmra.mxu0 %v192
    %v749 = vpop.f32.mrf.mxu0
    %v750 = vadd.f32 %v666, %v749
    %v751 = vpop.f32.mrf.mxu0
    %752 = vdwg.mxu0
    %v753 = vadd.f32 %v641, %v735
    %v754 = vadd.f32 %v642, %v740
    %v755 = vadd.f32 %v643, %v745
    %v756 = vadd.f32 %v644, %v750
    %v757 = vmax.f32 %v753, 0.0
    %v758 = vmax.f32 %v754, 0.0
    %v759 = vmax.f32 %v755, 0.0
    %v760 = vmax.f32 %v756, 0.0
    %761 = vst [vmem:[#allocation2 + $0x8] sm:$0xff] %v757
    %762 = vst [vmem:[#allocation2 + $0x10] sm:$0xff] %v758
    %763 = vst [vmem:[#allocation2 + $0x20] sm:$0xff] %v759
    %764 = vst [vmem:[#allocation2 + $0x28] sm:$0xff] %v760
    %v765 = vld [vmem:[#allocation2 + $0x8] sm:$0xff]
    %v766 = vld [vmem:[#allocation2 + $0x10] sm:$0xff]
    %v767 = vld [vmem:[#allocation2 + $0x20] sm:$0xff]
    %v768 = vld [vmem:[#allocation2 + $0x28] sm:$0xff]
    %v769 = vld [vmem:[#allocation2 + $0x6] sm:$0xff]
    %v770 = vld [vmem:[#allocation2 + $0xe] sm:$0xff]
    %v771 = vld [vmem:[#allocation2 + $0x1e] sm:$0xff]
    %v772 = vld [vmem:[#allocation2 + $0x26] sm:$0xff]
    %v773 = vld [vmem:[#allocation11] sm:$0xff]
    %v774 = vld [vmem:[#allocation11 + $0x8] sm:$0xff]
    %v775 = vld [vmem:[#allocation11 + $0x10] sm:$0xff]
    %v776 = vld [vmem:[#allocation11 + $0x18] sm:$0xff]
    %v777 = vld [vmem:[#allocation11 + $0x20] sm:$0xff]
    %v778 = vld [vmem:[#allocation11 + $0x28] sm:$0xff]
    %v779 = vld [vmem:[#allocation11 + $0x30] sm:$0xff]
    %v780 = vld [vmem:[#allocation11 + $0x38] sm:$0xff]
    %v781 = vld [vmem:[#allocation11 + $0x40] sm:$0xff]
    %v782 = vld [vmem:[#allocation11 + $0x48] sm:$0xff]
    %v783 = vld [vmem:[#allocation11 + $0x50] sm:$0xff]
    %v784 = vld [vmem:[#allocation11 + $0x58] sm:$0xff]
    %v785 = vld [vmem:[#allocation11 + $0x60] sm:$0xff]
    %v786 = vld [vmem:[#allocation11 + $0x68] sm:$0xff]
    %v787 = vld [vmem:[#allocation11 + $0x70] sm:$0xff]
    %v788 = vld [vmem:[#allocation11 + $0x78] sm:$0xff]
    %s789 = scalar_lea.vmem [#allocation11], 128
    %v790 = vld [vmem:[%s789] sm:$0xff]
    %v791 = vld [vmem:[%s789 + $0x8] sm:$0xff]
    %v792 = vld [vmem:[%s789 + $0x10] sm:$0xff]
    %v793 = vld [vmem:[%s789 + $0x18] sm:$0xff]
    %v794 = vld [vmem:[%s789 + $0x20] sm:$0xff]
    %v795 = vld [vmem:[%s789 + $0x28] sm:$0xff]
    %v796 = vld [vmem:[%s789 + $0x30] sm:$0xff]
    %v797 = vld [vmem:[%s789 + $0x38] sm:$0xff]
    %v798 = vld [vmem:[%s789 + $0x40] sm:$0xff]
    %v799 = vld [vmem:[%s789 + $0x48] sm:$0xff]
    %v800 = vld [vmem:[%s789 + $0x50] sm:$0xff]
    %v801 = vld [vmem:[%s789 + $0x58] sm:$0xff]
    %v802 = vld [vmem:[%s789 + $0x60] sm:$0xff]
    %v803 = vld [vmem:[%s789 + $0x68] sm:$0xff]
    %v804 = vld [vmem:[%s789 + $0x70] sm:$0xff]
    %v805 = vld [vmem:[%s789 + $0x78] sm:$0xff]
    %806 = vmatprep.subr.mxu0 0.0
    %807 = vmatpush1.msra.mxu0 %v805
    %808 = vmatprep.subr.mxu0 0.0
    %809 = vmatpush1.msra.mxu0 %v804
    %810 = vmatprep.subr.mxu0 0.0
    %811 = vmatpush1.msra.mxu0 %v803
    %812 = vmatprep.subr.mxu0 0.0
    %813 = vmatpush1.msra.mxu0 %v802
    %814 = vmatprep.subr.mxu0 0.0
    %815 = vmatpush1.msra.mxu0 %v801
    %816 = vmatprep.subr.mxu0 0.0
    %817 = vmatpush1.msra.mxu0 %v800
    %818 = vmatprep.subr.mxu0 0.0
    %819 = vmatpush1.msra.mxu0 %v799
    %820 = vmatprep.subr.mxu0 0.0
    %821 = vmatpush1.msra.mxu0 %v798
    %822 = vmatprep.subr.mxu0 0.0
    %823 = vmatpush1.msra.mxu0 %v797
    %824 = vmatprep.subr.mxu0 0.0
    %825 = vmatpush1.msra.mxu0 %v796
    %826 = vmatprep.subr.mxu0 0.0
    %827 = vmatpush1.msra.mxu0 %v795
    %828 = vmatprep.subr.mxu0 0.0
    %829 = vmatpush1.msra.mxu0 %v794
    %830 = vmatprep.subr.mxu0 0.0
    %831 = vmatpush1.msra.mxu0 %v793
    %832 = vmatprep.subr.mxu0 0.0
    %833 = vmatpush1.msra.mxu0 %v792
    %834 = vmatprep.subr.mxu0 0.0
    %835 = vmatpush1.msra.mxu0 %v791
    %836 = vmatprep.subr.mxu0 0.0
    %837 = vmatpush1.msra.mxu0 %v790
    %838 = vmatprep.subr.mxu0 0.0
    %839 = vmatpush2.msra.mxu0 0.0
    %840 = vmatprep.subr.mxu0 0.0
    %841 = vmatpush2.msra.mxu0 0.0
    %842 = vmatprep.subr.mxu0 0.0
    %843 = vmatpush2.msra.mxu0 0.0
    %844 = vmatprep.subr.mxu0 0.0
    %845 = vmatpush2.msra.mxu0 0.0
    %846 = vmatprep.subr.mxu0 0.0
    %847 = vmatpush2.msra.mxu0 0.0
    %848 = vmatprep.subr.mxu0 0.0
    %849 = vmatpush2.msra.mxu0 0.0
    %850 = vmatprep.subr.mxu0 0.0
    %851 = vmatpush2.msra.mxu0 0.0
    %852 = vmatprep.subr.mxu0 0.0
    %853 = vmatpush2.msra.mxu0 0.0
    %854 = vmatprep.subr.mxu0 0.0
    %855 = vmatpush2.msra.mxu0 0.0
    %856 = vmatprep.subr.mxu0 0.0
    %857 = vmatpush2.msra.mxu0 0.0
    %858 = vmatprep.subr.mxu0 0.0
    %859 = vmatpush2.msra.mxu0 0.0
    %860 = vmatprep.subr.mxu0 0.0
    %861 = vmatpush2.msra.mxu0 0.0
    %862 = vmatprep.subr.mxu0 0.0
    %863 = vmatpush2.msra.mxu0 0.0
    %864 = vmatprep.subr.mxu0 0.0
    %865 = vmatpush2.msra.mxu0 0.0
    %866 = vmatprep.subr.mxu0 0.0
    %867 = vmatpush2.msra.mxu0 0.0
    %868 = vmatprep.subr.mxu0 0.0
    %869 = vmatpush2.msra.mxu0 0.0
    %870 = vmatprep.mubr.f32.mxu0 0.0
    %871 = vmatmul.mubr.f32.gmra.mxu0 %v765
    %v872 = vpop.f32.mrf.mxu0
    %v873 = vadd.f32 0.0, %v872
    %v874 = vpop.f32.mrf.mxu0
    %875 = vmatprep.mubr.f32.mxu0 0.0
    %876 = vmatmul.mubr.f32.gmra.mxu0 %v766
    %v877 = vpop.f32.mrf.mxu0
    %v878 = vadd.f32 0.0, %v877
    %v879 = vpop.f32.mrf.mxu0
    %880 = vmatprep.mubr.f32.mxu0 0.0
    %881 = vmatmul.mubr.f32.gmra.mxu0 %v767
    %v882 = vpop.f32.mrf.mxu0
    %v883 = vadd.f32 0.0, %v882
    %v884 = vpop.f32.mrf.mxu0
    %885 = vmatprep.mubr.f32.mxu0 0.0
    %886 = vmatmul.mubr.f32.gmra.mxu0 %v768
    %v887 = vpop.f32.mrf.mxu0
    %v888 = vadd.f32 0.0, %v887
    %v889 = vpop.f32.mrf.mxu0
    %890 = vdwg.mxu0
    %891 = vmatprep.subr.mxu0 0.0
    %892 = vmatpush1.msra.mxu0 %v788
    %893 = vmatprep.subr.mxu0 0.0
    %894 = vmatpush1.msra.mxu0 %v787
    %895 = vmatprep.subr.mxu0 0.0
    %896 = vmatpush1.msra.mxu0 %v786
    %897 = vmatprep.subr.mxu0 0.0
    %898 = vmatpush1.msra.mxu0 %v785
    %899 = vmatprep.subr.mxu0 0.0
    %900 = vmatpush1.msra.mxu0 %v784
    %901 = vmatprep.subr.mxu0 0.0
    %902 = vmatpush1.msra.mxu0 %v783
    %903 = vmatprep.subr.mxu0 0.0
    %904 = vmatpush1.msra.mxu0 %v782
    %905 = vmatprep.subr.mxu0 0.0
    %906 = vmatpush1.msra.mxu0 %v781
    %907 = vmatprep.subr.mxu0 0.0
    %908 = vmatpush1.msra.mxu0 %v780
    %909 = vmatprep.subr.mxu0 0.0
    %910 = vmatpush1.msra.mxu0 %v779
    %911 = vmatprep.subr.mxu0 0.0
    %912 = vmatpush1.msra.mxu0 %v778
    %913 = vmatprep.subr.mxu0 0.0
    %914 = vmatpush1.msra.mxu0 %v777
    %915 = vmatprep.subr.mxu0 0.0
    %916 = vmatpush1.msra.mxu0 %v776
    %917 = vmatprep.subr.mxu0 0.0
    %918 = vmatpush1.msra.mxu0 %v775
    %919 = vmatprep.subr.mxu0 0.0
    %920 = vmatpush1.msra.mxu0 %v774
    %921 = vmatprep.subr.mxu0 0.0
    %922 = vmatpush1.msra.mxu0 %v773
    %923 = vmatprep.subr.mxu0 0.0
    %924 = vmatpush2.msra.mxu0 0.0
    %925 = vmatprep.subr.mxu0 0.0
    %926 = vmatpush2.msra.mxu0 0.0
    %927 = vmatprep.subr.mxu0 0.0
    %928 = vmatpush2.msra.mxu0 0.0
    %929 = vmatprep.subr.mxu0 0.0
    %930 = vmatpush2.msra.mxu0 0.0
    %931 = vmatprep.subr.mxu0 0.0
    %932 = vmatpush2.msra.mxu0 0.0
    %933 = vmatprep.subr.mxu0 0.0
    %934 = vmatpush2.msra.mxu0 0.0
    %935 = vmatprep.subr.mxu0 0.0
    %936 = vmatpush2.msra.mxu0 0.0
    %937 = vmatprep.subr.mxu0 0.0
    %938 = vmatpush2.msra.mxu0 0.0
    %939 = vmatprep.subr.mxu0 0.0
    %940 = vmatpush2.msra.mxu0 0.0
    %941 = vmatprep.subr.mxu0 0.0
    %942 = vmatpush2.msra.mxu0 0.0
    %943 = vmatprep.subr.mxu0 0.0
    %944 = vmatpush2.msra.mxu0 0.0
    %945 = vmatprep.subr.mxu0 0.0
    %946 = vmatpush2.msra.mxu0 0.0
    %947 = vmatprep.subr.mxu0 0.0
    %948 = vmatpush2.msra.mxu0 0.0
    %949 = vmatprep.subr.mxu0 0.0
    %950 = vmatpush2.msra.mxu0 0.0
    %951 = vmatprep.subr.mxu0 0.0
    %952 = vmatpush2.msra.mxu0 0.0
    %953 = vmatprep.subr.mxu0 0.0
    %954 = vmatpush2.msra.mxu0 0.0
    %955 = vmatprep.mubr.f32.mxu0 0.0
    %956 = vmatmul.mubr.f32.gmra.mxu0 %v769
    %v957 = vpop.f32.mrf.mxu0
    %v958 = vadd.f32 %v873, %v957
    %v959 = vpop.f32.mrf.mxu0
    %960 = vmatprep.mubr.f32.mxu0 0.0
    %961 = vmatmul.mubr.f32.gmra.mxu0 %v770
    %v962 = vpop.f32.mrf.mxu0
    %v963 = vadd.f32 %v878, %v962
    %v964 = vpop.f32.mrf.mxu0
    %965 = vmatprep.mubr.f32.mxu0 0.0
    %966 = vmatmul.mubr.f32.gmra.mxu0 %v771
    %v967 = vpop.f32.mrf.mxu0
    %v968 = vadd.f32 %v883, %v967
    %v969 = vpop.f32.mrf.mxu0
    %970 = vmatprep.mubr.f32.mxu0 0.0
    %971 = vmatmul.mubr.f32.gmra.mxu0 %v772
    %v972 = vpop.f32.mrf.mxu0
    %v973 = vadd.f32 %v888, %v972
    %v974 = vpop.f32.mrf.mxu0
    %975 = vdwg.mxu0
    %v976 = vld [vmem:[#allocation12] sm:$0x1]
    %v978 = vlaneseq
    %v979 = vshrl.u32 %v978, 7
    %v980 = vsub.s32 0, %v979
    %v981 = vrot.slane %v976, %v980
    %v983 = vadd.f32 %v958, %v981
    %v984 = vadd.f32 %v963, %v981
    %v985 = vadd.f32 %v968, %v981
    %v986 = vadd.f32 %v973, %v981
    %v987 = vmax.f32 %v983, 0.0
    %v988 = vmax.f32 %v984, 0.0
    %v989 = vmax.f32 %v985, 0.0
    %v990 = vmax.f32 %v986, 0.0
    %991 = vst [vmem:[#allocation2 + $0x8] sm:$0xff] %v987
    %992 = vst [vmem:[#allocation2 + $0x10] sm:$0xff] %v988
    %993 = vst [vmem:[#allocation2 + $0x20] sm:$0xff] %v989
    %994 = vst [vmem:[#allocation2 + $0x28] sm:$0xff] %v990
    %v995 = vld [vmem:[#allocation2 + $0x6] sm:$0xff]
    %v996 = vld [vmem:[#allocation2 + $0xe] sm:$0xff]
    %v997 = vld [vmem:[#allocation2 + $0x1e] sm:$0xff]
    %v998 = vld [vmem:[#allocation2 + $0x26] sm:$0xff]
    %v999 = vld [vmem:[#allocation14] sm:$0xff]
    %v1000 = vld [vmem:[#allocation14 + $0x8] sm:$0xff]
    %v1001 = vld [vmem:[#allocation14 + $0x10] sm:$0xff]
    %v1002 = vld [vmem:[#allocation14 + $0x18] sm:$0xff]
    %v1003 = vld [vmem:[#allocation14 + $0x20] sm:$0xff]
    %v1004 = vld [vmem:[#allocation14 + $0x28] sm:$0xff]
    %v1005 = vld [vmem:[#allocation14 + $0x30] sm:$0xff]
    %v1006 = vld [vmem:[#allocation14 + $0x38] sm:$0xff]
    %v1007 = vld [vmem:[#allocation14 + $0x40] sm:$0xff]
    %v1008 = vld [vmem:[#allocation14 + $0x48] sm:$0xff]
    %v1009 = vld [vmem:[#allocation14 + $0x50] sm:$0xff]
    %v1010 = vld [vmem:[#allocation14 + $0x58] sm:$0xff]
    %v1011 = vld [vmem:[#allocation14 + $0x60] sm:$0xff]
    %v1012 = vld [vmem:[#allocation14 + $0x68] sm:$0xff]
    %v1013 = vld [vmem:[#allocation14 + $0x70] sm:$0xff]
    %v1014 = vld [vmem:[#allocation14 + $0x78] sm:$0xff]
    %v1015 = vld [vmem:[#allocation2 + $0x8] sm:$0xff]
    %v1016 = vld [vmem:[#allocation2 + $0x10] sm:$0xff]
    %v1017 = vld [vmem:[#allocation2 + $0x20] sm:$0xff]
    %v1018 = vld [vmem:[#allocation2 + $0x28] sm:$0xff]
    %s1019 = scalar_lea.vmem [#allocation14], 128
    %v1020 = vld [vmem:[%s1019] sm:$0xff]
    %v1021 = vld [vmem:[%s1019 + $0x8] sm:$0xff]
    %v1022 = vld [vmem:[%s1019 + $0x10] sm:$0xff]
    %v1023 = vld [vmem:[%s1019 + $0x18] sm:$0xff]
    %v1024 = vld [vmem:[%s1019 + $0x20] sm:$0xff]
    %v1025 = vld [vmem:[%s1019 + $0x28] sm:$0xff]
    %v1026 = vld [vmem:[%s1019 + $0x30] sm:$0xff]
    %v1027 = vld [vmem:[%s1019 + $0x38] sm:$0xff]
    %v1028 = vld [vmem:[%s1019 + $0x40] sm:$0xff]
    %v1029 = vld [vmem:[%s1019 + $0x48] sm:$0xff]
    %v1030 = vld [vmem:[%s1019 + $0x50] sm:$0xff]
    %v1031 = vld [vmem:[%s1019 + $0x58] sm:$0xff]
    %v1032 = vld [vmem:[%s1019 + $0x60] sm:$0xff]
    %v1033 = vld [vmem:[%s1019 + $0x68] sm:$0xff]
    %v1034 = vld [vmem:[%s1019 + $0x70] sm:$0xff]
    %v1035 = vld [vmem:[%s1019 + $0x78] sm:$0xff]
    %1036 = vmatprep.subr.mxu0 0.0
    %1037 = vmatpush1.msra.mxu0 %v1035
    %1038 = vmatprep.subr.mxu0 0.0
    %1039 = vmatpush1.msra.mxu0 %v1034
    %1040 = vmatprep.subr.mxu0 0.0
    %1041 = vmatpush1.msra.mxu0 %v1033
    %1042 = vmatprep.subr.mxu0 0.0
    %1043 = vmatpush1.msra.mxu0 %v1032
    %1044 = vmatprep.subr.mxu0 0.0
    %1045 = vmatpush1.msra.mxu0 %v1031
    %1046 = vmatprep.subr.mxu0 0.0
    %1047 = vmatpush1.msra.mxu0 %v1030
    %1048 = vmatprep.subr.mxu0 0.0
    %1049 = vmatpush1.msra.mxu0 %v1029
    %1050 = vmatprep.subr.mxu0 0.0
    %1051 = vmatpush1.msra.mxu0 %v1028
    %1052 = vmatprep.subr.mxu0 0.0
    %1053 = vmatpush1.msra.mxu0 %v1027
    %1054 = vmatprep.subr.mxu0 0.0
    %1055 = vmatpush1.msra.mxu0 %v1026
    %1056 = vmatprep.subr.mxu0 0.0
    %1057 = vmatpush1.msra.mxu0 %v1025
    %1058 = vmatprep.subr.mxu0 0.0
    %1059 = vmatpush1.msra.mxu0 %v1024
    %1060 = vmatprep.subr.mxu0 0.0
    %1061 = vmatpush1.msra.mxu0 %v1023
    %1062 = vmatprep.subr.mxu0 0.0
    %1063 = vmatpush1.msra.mxu0 %v1022
    %1064 = vmatprep.subr.mxu0 0.0
    %1065 = vmatpush1.msra.mxu0 %v1021
    %1066 = vmatprep.subr.mxu0 0.0
    %1067 = vmatpush1.msra.mxu0 %v1020
    %1068 = vmatprep.subr.mxu0 0.0
    %1069 = vmatpush2.msra.mxu0 0.0
    %1070 = vmatprep.subr.mxu0 0.0
    %1071 = vmatpush2.msra.mxu0 0.0
    %1072 = vmatprep.subr.mxu0 0.0
    %1073 = vmatpush2.msra.mxu0 0.0
    %1074 = vmatprep.subr.mxu0 0.0
    %1075 = vmatpush2.msra.mxu0 0.0
    %1076 = vmatprep.subr.mxu0 0.0
    %1077 = vmatpush2.msra.mxu0 0.0
    %1078 = vmatprep.subr.mxu0 0.0
    %1079 = vmatpush2.msra.mxu0 0.0
    %1080 = vmatprep.subr.mxu0 0.0
    %1081 = vmatpush2.msra.mxu0 0.0
    %1082 = vmatprep.subr.mxu0 0.0
    %1083 = vmatpush2.msra.mxu0 0.0
    %1084 = vmatprep.subr.mxu0 0.0
    %1085 = vmatpush2.msra.mxu0 0.0
    %1086 = vmatprep.subr.mxu0 0.0
    %1087 = vmatpush2.msra.mxu0 0.0
    %1088 = vmatprep.subr.mxu0 0.0
    %1089 = vmatpush2.msra.mxu0 0.0
    %1090 = vmatprep.subr.mxu0 0.0
    %1091 = vmatpush2.msra.mxu0 0.0
    %1092 = vmatprep.subr.mxu0 0.0
    %1093 = vmatpush2.msra.mxu0 0.0
    %1094 = vmatprep.subr.mxu0 0.0
    %1095 = vmatpush2.msra.mxu0 0.0
    %1096 = vmatprep.subr.mxu0 0.0
    %1097 = vmatpush2.msra.mxu0 0.0
    %1098 = vmatprep.subr.mxu0 0.0
    %1099 = vmatpush2.msra.mxu0 0.0
    %1100 = vmatprep.mubr.f32.mxu0 0.0
    %1101 = vmatmul.mubr.f32.gmra.mxu0 %v1015
    %v1102 = vpop.f32.mrf.mxu0
    %v1103 = vadd.f32 0.0, %v1102
    %v1104 = vpop.f32.mrf.mxu0
    %1105 = vmatprep.mubr.f32.mxu0 0.0
    %1106 = vmatmul.mubr.f32.gmra.mxu0 %v1016
    %v1107 = vpop.f32.mrf.mxu0
    %v1108 = vadd.f32 0.0, %v1107
    %v1109 = vpop.f32.mrf.mxu0
    %1110 = vmatprep.mubr.f32.mxu0 0.0
    %1111 = vmatmul.mubr.f32.gmra.mxu0 %v1017
    %v1112 = vpop.f32.mrf.mxu0
    %v1113 = vadd.f32 0.0, %v1112
    %v1114 = vpop.f32.mrf.mxu0
    %1115 = vmatprep.mubr.f32.mxu0 0.0
    %1116 = vmatmul.mubr.f32.gmra.mxu0 %v1018
    %v1117 = vpop.f32.mrf.mxu0
    %v1118 = vadd.f32 0.0, %v1117
    %v1119 = vpop.f32.mrf.mxu0
    %1120 = vdwg.mxu0
    %1121 = vmatprep.subr.mxu0 0.0
    %1122 = vmatpush1.msra.mxu0 %v1014
    %1123 = vmatprep.subr.mxu0 0.0
    %1124 = vmatpush1.msra.mxu0 %v1013
    %1125 = vmatprep.subr.mxu0 0.0
    %1126 = vmatpush1.msra.mxu0 %v1012
    %1127 = vmatprep.subr.mxu0 0.0
    %1128 = vmatpush1.msra.mxu0 %v1011
    %1129 = vmatprep.subr.mxu0 0.0
    %1130 = vmatpush1.msra.mxu0 %v1010
    %1131 = vmatprep.subr.mxu0 0.0
    %1132 = vmatpush1.msra.mxu0 %v1009
    %1133 = vmatprep.subr.mxu0 0.0
    %1134 = vmatpush1.msra.mxu0 %v1008
    %1135 = vmatprep.subr.mxu0 0.0
    %1136 = vmatpush1.msra.mxu0 %v1007
    %1137 = vmatprep.subr.mxu0 0.0
    %1138 = vmatpush1.msra.mxu0 %v1006
    %1139 = vmatprep.subr.mxu0 0.0
    %1140 = vmatpush1.msra.mxu0 %v1005
    %1141 = vmatprep.subr.mxu0 0.0
    %1142 = vmatpush1.msra.mxu0 %v1004
    %1143 = vmatprep.subr.mxu0 0.0
    %1144 = vmatpush1.msra.mxu0 %v1003
    %1145 = vmatprep.subr.mxu0 0.0
    %1146 = vmatpush1.msra.mxu0 %v1002
    %1147 = vmatprep.subr.mxu0 0.0
    %1148 = vmatpush1.msra.mxu0 %v1001
    %1149 = vmatprep.subr.mxu0 0.0
    %1150 = vmatpush1.msra.mxu0 %v1000
    %1151 = vmatprep.subr.mxu0 0.0
    %1152 = vmatpush1.msra.mxu0 %v999
    %1153 = vmatprep.subr.mxu0 0.0
    %1154 = vmatpush2.msra.mxu0 0.0
    %1155 = vmatprep.subr.mxu0 0.0
    %1156 = vmatpush2.msra.mxu0 0.0
    %1157 = vmatprep.subr.mxu0 0.0
    %1158 = vmatpush2.msra.mxu0 0.0
    %1159 = vmatprep.subr.mxu0 0.0
    %1160 = vmatpush2.msra.mxu0 0.0
    %1161 = vmatprep.subr.mxu0 0.0
    %1162 = vmatpush2.msra.mxu0 0.0
    %1163 = vmatprep.subr.mxu0 0.0
    %1164 = vmatpush2.msra.mxu0 0.0
    %1165 = vmatprep.subr.mxu0 0.0
    %1166 = vmatpush2.msra.mxu0 0.0
    %1167 = vmatprep.subr.mxu0 0.0
    %1168 = vmatpush2.msra.mxu0 0.0
    %1169 = vmatprep.subr.mxu0 0.0
    %1170 = vmatpush2.msra.mxu0 0.0
    %1171 = vmatprep.subr.mxu0 0.0
    %1172 = vmatpush2.msra.mxu0 0.0
    %1173 = vmatprep.subr.mxu0 0.0
    %1174 = vmatpush2.msra.mxu0 0.0
    %1175 = vmatprep.subr.mxu0 0.0
    %1176 = vmatpush2.msra.mxu0 0.0
    %1177 = vmatprep.subr.mxu0 0.0
    %1178 = vmatpush2.msra.mxu0 0.0
    %1179 = vmatprep.subr.mxu0 0.0
    %1180 = vmatpush2.msra.mxu0 0.0
    %1181 = vmatprep.subr.mxu0 0.0
    %1182 = vmatpush2.msra.mxu0 0.0
    %1183 = vmatprep.subr.mxu0 0.0
    %1184 = vmatpush2.msra.mxu0 0.0
    %1185 = vmatprep.mubr.f32.mxu0 0.0
    %1186 = vmatmul.mubr.f32.gmra.mxu0 %v995
    %v1187 = vpop.f32.mrf.mxu0
    %v1188 = vadd.f32 %v1103, %v1187
    %v1189 = vpop.f32.mrf.mxu0
    %1190 = vmatprep.mubr.f32.mxu0 0.0
    %1191 = vmatmul.mubr.f32.gmra.mxu0 %v996
    %v1192 = vpop.f32.mrf.mxu0
    %v1193 = vadd.f32 %v1108, %v1192
    %v1194 = vpop.f32.mrf.mxu0
    %1195 = vmatprep.mubr.f32.mxu0 0.0
    %1196 = vmatmul.mubr.f32.gmra.mxu0 %v997
    %v1197 = vpop.f32.mrf.mxu0
    %v1198 = vadd.f32 %v1113, %v1197
    %v1199 = vpop.f32.mrf.mxu0
    %1200 = vmatprep.mubr.f32.mxu0 0.0
    %1201 = vmatmul.mubr.f32.gmra.mxu0 %v998
    %v1202 = vpop.f32.mrf.mxu0
    %v1203 = vadd.f32 %v1118, %v1202
    %v1204 = vpop.f32.mrf.mxu0
    %1205 = vdwg.mxu0
    %v1206 = vld [vmem:[#allocation15] sm:$0x1]
    %v1208 = vlaneseq
    %v1209 = vshrl.u32 %v1208, 7
    %v1210 = vsub.s32 0, %v1209
    %v1211 = vrot.slane %v1206, %v1210
    %v1213 = vadd.f32 %v1188, %v1211
    %v1214 = vadd.f32 %v1193, %v1211
    %v1215 = vadd.f32 %v1198, %v1211
    %v1216 = vadd.f32 %v1203, %v1211
    %v1217 = vmax.f32 %v1213, 0.0
    %v1218 = vmax.f32 %v1214, 0.0
    %v1219 = vmax.f32 %v1215, 0.0
    %v1220 = vmax.f32 %v1216, 0.0
    %v1221 = vld [vmem:[%s11] sm:$0xff]
    %v1222 = vld [vmem:[%s11 + $0x8] sm:$0xff]
    %v1223 = vld [vmem:[%s11 + $0x10] sm:$0xff]
    %v1224 = vld [vmem:[%s11 + $0x18] sm:$0xff]
    %v1225 = vld [vmem:[%s11 + $0x20] sm:$0xff]
    %v1226 = vld [vmem:[%s11 + $0x28] sm:$0xff]
    %v1227 = vld [vmem:[%s11 + $0x30] sm:$0xff]
    %v1228 = vld [vmem:[%s11 + $0x38] sm:$0xff]
    %v1229 = vld [vmem:[%s11 + $0x40] sm:$0xff]
    %v1230 = vld [vmem:[%s11 + $0x48] sm:$0xff]
    %v1231 = vld [vmem:[%s11 + $0x50] sm:$0xff]
    %v1232 = vld [vmem:[%s11 + $0x58] sm:$0xff]
    %v1233 = vld [vmem:[%s11 + $0x60] sm:$0xff]
    %v1234 = vld [vmem:[%s11 + $0x68] sm:$0xff]
    %v1235 = vld [vmem:[%s11 + $0x70] sm:$0xff]
    %v1236 = vld [vmem:[%s11 + $0x78] sm:$0xff]
    %v1237 = vld [vmem:[#allocation17] sm:$0x1]
    %v1239 = vlaneseq
    %v1240 = vshrl.u32 %v1239, 7
    %v1241 = vsub.s32 0, %v1240
    %v1242 = vrot.slane %v1237, %v1241
    %1244 = vmatprep.subr.mxu0 0.0
    %1245 = vmatpush1.msra.mxu0 %v1236
    %1246 = vmatprep.subr.mxu0 0.0
    %1247 = vmatpush1.msra.mxu0 %v1235
    %1248 = vmatprep.subr.mxu0 0.0
    %1249 = vmatpush1.msra.mxu0 %v1234
    %1250 = vmatprep.subr.mxu0 0.0
    %1251 = vmatpush1.msra.mxu0 %v1233
    %1252 = vmatprep.subr.mxu0 0.0
    %1253 = vmatpush1.msra.mxu0 %v1232
    %1254 = vmatprep.subr.mxu0 0.0
    %1255 = vmatpush1.msra.mxu0 %v1231
    %1256 = vmatprep.subr.mxu0 0.0
    %1257 = vmatpush1.msra.mxu0 %v1230
    %1258 = vmatprep.subr.mxu0 0.0
    %1259 = vmatpush1.msra.mxu0 %v1229
    %1260 = vmatprep.subr.mxu0 0.0
    %1261 = vmatpush1.msra.mxu0 %v1228
    %1262 = vmatprep.subr.mxu0 0.0
    %1263 = vmatpush1.msra.mxu0 %v1227
    %1264 = vmatprep.subr.mxu0 0.0
    %1265 = vmatpush1.msra.mxu0 %v1226
    %1266 = vmatprep.subr.mxu0 0.0
    %1267 = vmatpush1.msra.mxu0 %v1225
    %1268 = vmatprep.subr.mxu0 0.0
    %1269 = vmatpush1.msra.mxu0 %v1224
    %1270 = vmatprep.subr.mxu0 0.0
    %1271 = vmatpush1.msra.mxu0 %v1223
    %1272 = vmatprep.subr.mxu0 0.0
    %1273 = vmatpush1.msra.mxu0 %v1222
    %1274 = vmatprep.subr.mxu0 0.0
    %1275 = vmatpush1.msra.mxu0 %v1221
    %1276 = vmatprep.subr.mxu0 0.0
    %1277 = vmatpush2.msra.mxu0 0.0
    %1278 = vmatprep.subr.mxu0 0.0
    %1279 = vmatpush2.msra.mxu0 0.0
    %1280 = vmatprep.subr.mxu0 0.0
    %1281 = vmatpush2.msra.mxu0 0.0
    %1282 = vmatprep.subr.mxu0 0.0
    %1283 = vmatpush2.msra.mxu0 0.0
    %1284 = vmatprep.subr.mxu0 0.0
    %1285 = vmatpush2.msra.mxu0 0.0
    %1286 = vmatprep.subr.mxu0 0.0
    %1287 = vmatpush2.msra.mxu0 0.0
    %1288 = vmatprep.subr.mxu0 0.0
    %1289 = vmatpush2.msra.mxu0 0.0
    %1290 = vmatprep.subr.mxu0 0.0
    %1291 = vmatpush2.msra.mxu0 0.0
    %1292 = vmatprep.subr.mxu0 0.0
    %1293 = vmatpush2.msra.mxu0 0.0
    %1294 = vmatprep.subr.mxu0 0.0
    %1295 = vmatpush2.msra.mxu0 0.0
    %1296 = vmatprep.subr.mxu0 0.0
    %1297 = vmatpush2.msra.mxu0 0.0
    %1298 = vmatprep.subr.mxu0 0.0
    %1299 = vmatpush2.msra.mxu0 0.0
    %1300 = vmatprep.subr.mxu0 0.0
    %1301 = vmatpush2.msra.mxu0 0.0
    %1302 = vmatprep.subr.mxu0 0.0
    %1303 = vmatpush2.msra.mxu0 0.0
    %1304 = vmatprep.subr.mxu0 0.0
    %1305 = vmatpush2.msra.mxu0 0.0
    %1306 = vmatprep.subr.mxu0 0.0
    %1307 = vmatpush2.msra.mxu0 0.0
    %1308 = vmatprep.mubr.f32.mxu0 0.0
    %1309 = vmatmul.mubr.f32.gmra.mxu0 %v765
    %v1310 = vpop.f32.mrf.mxu0
    %v1311 = vadd.f32 %v1242, %v1310
    %v1312 = vpop.f32.mrf.mxu0
    %1313 = vmatprep.mubr.f32.mxu0 0.0
    %1314 = vmatmul.mubr.f32.gmra.mxu0 %v766
    %v1315 = vpop.f32.mrf.mxu0
    %v1316 = vadd.f32 %v1242, %v1315
    %v1317 = vpop.f32.mrf.mxu0
    %1318 = vmatprep.mubr.f32.mxu0 0.0
    %1319 = vmatmul.mubr.f32.gmra.mxu0 %v767
    %v1320 = vpop.f32.mrf.mxu0
    %v1321 = vadd.f32 %v1242, %v1320
    %v1322 = vpop.f32.mrf.mxu0
    %1323 = vmatprep.mubr.f32.mxu0 0.0
    %1324 = vmatmul.mubr.f32.gmra.mxu0 %v768
    %v1325 = vpop.f32.mrf.mxu0
    %v1326 = vadd.f32 %v1242, %v1325
    %v1327 = vpop.f32.mrf.mxu0
    %1328 = vdwg.mxu0
    %v1329 = vadd.f32 %v1217, %v1311
    %v1330 = vadd.f32 %v1218, %v1316
    %v1331 = vadd.f32 %v1219, %v1321
    %v1332 = vadd.f32 %v1220, %v1326
    %v1333 = vmax.f32 %v1329, 0.0
    %v1334 = vmax.f32 %v1330, 0.0
    %v1335 = vmax.f32 %v1331, 0.0
    %v1336 = vmax.f32 %v1332, 0.0
    %1337 = vst [vmem:[#allocation2 + $0x8] sm:$0xff] %v1333
    %1338 = vst [vmem:[#allocation2 + $0x10] sm:$0xff] %v1334
    %1339 = vst [vmem:[#allocation2 + $0x20] sm:$0xff] %v1335
    %1340 = vst [vmem:[#allocation2 + $0x28] sm:$0xff] %v1336
    %v1341 = vld [vmem:[#allocation2 + $0x17] sm:$0x1]
    %v1342 = vld [vmem:[#allocation2 + $0x2f] sm:$0x1]
    %v1343 = vld [vmem:[#allocation18] sm:$0xff]
    %v1344 = vld [vmem:[#allocation18 + $0x8] sm:$0xff]
    %v1345 = vld [vmem:[#allocation18 + $0x10] sm:$0xff]
    %v1346 = vld [vmem:[#allocation18 + $0x18] sm:$0xff]
    %v1347 = vld [vmem:[#allocation18 + $0x20] sm:$0xff]
    %v1348 = vld [vmem:[#allocation18 + $0x28] sm:$0xff]
    %v1349 = vld [vmem:[#allocation18 + $0x30] sm:$0xff]
    %v1350 = vld [vmem:[#allocation18 + $0x38] sm:$0xff]
    %v1351 = vld [vmem:[#allocation18 + $0x40] sm:$0xff]
    %v1352 = vld [vmem:[#allocation18 + $0x48] sm:$0xff]
    %v1353 = vld [vmem:[#allocation18 + $0x50] sm:$0xff]
    %v1354 = vld [vmem:[#allocation18 + $0x58] sm:$0xff]
    %v1355 = vld [vmem:[#allocation18 + $0x60] sm:$0xff]
    %v1356 = vld [vmem:[#allocation18 + $0x68] sm:$0xff]
    %v1357 = vld [vmem:[#allocation18 + $0x70] sm:$0xff]
    %v1358 = vld [vmem:[#allocation18 + $0x78] sm:$0xff]
    %v1359 = vld [vmem:[%s14] sm:$0x1]
    %v1361 = vlaneseq
    %v1362 = vshrl.u32 %v1361, 7
    %v1363 = vsub.s32 0, %v1362
    %v1364 = vrot.slane %v1359, %v1363
    %v1368 = vrot.slane %v1342, 7
    %vm1369 = vcmask 1041409
    %v1370 = vsel %vm1369, %v1368, %v1341
    %1372 = vmatprep.subr.mxu0 0.0
    %1373 = vmatpush1.msra.mxu0 %v1358
    %1374 = vmatprep.subr.mxu0 0.0
    %1375 = vmatpush1.msra.mxu0 %v1357
    %1376 = vmatprep.subr.mxu0 0.0
    %1377 = vmatpush1.msra.mxu0 %v1356
    %1378 = vmatprep.subr.mxu0 0.0
    %1379 = vmatpush1.msra.mxu0 %v1355
    %1380 = vmatprep.subr.mxu0 0.0
    %1381 = vmatpush1.msra.mxu0 %v1354
    %1382 = vmatprep.subr.mxu0 0.0
    %1383 = vmatpush1.msra.mxu0 %v1353
    %1384 = vmatprep.subr.mxu0 0.0
    %1385 = vmatpush1.msra.mxu0 %v1352
    %1386 = vmatprep.subr.mxu0 0.0
    %1387 = vmatpush1.msra.mxu0 %v1351
    %1388 = vmatprep.subr.mxu0 0.0
    %1389 = vmatpush1.msra.mxu0 %v1350
    %1390 = vmatprep.subr.mxu0 0.0
    %1391 = vmatpush1.msra.mxu0 %v1349
    %1392 = vmatprep.subr.mxu0 0.0
    %1393 = vmatpush1.msra.mxu0 %v1348
    %1394 = vmatprep.subr.mxu0 0.0
    %1395 = vmatpush1.msra.mxu0 %v1347
    %1396 = vmatprep.subr.mxu0 0.0
    %1397 = vmatpush1.msra.mxu0 %v1346
    %1398 = vmatprep.subr.mxu0 0.0
    %1399 = vmatpush1.msra.mxu0 %v1345
    %1400 = vmatprep.subr.mxu0 0.0
    %1401 = vmatpush1.msra.mxu0 %v1344
    %1402 = vmatprep.subr.mxu0 0.0
    %1403 = vmatpush1.msra.mxu0 %v1343
    %1404 = vmatprep.subr.mxu0 0.0
    %1405 = vmatpush2.msra.mxu0 0.0
    %1406 = vmatprep.subr.mxu0 0.0
    %1407 = vmatpush2.msra.mxu0 0.0
    %1408 = vmatprep.subr.mxu0 0.0
    %1409 = vmatpush2.msra.mxu0 0.0
    %1410 = vmatprep.subr.mxu0 0.0
    %1411 = vmatpush2.msra.mxu0 0.0
    %1412 = vmatprep.subr.mxu0 0.0
    %1413 = vmatpush2.msra.mxu0 0.0
    %1414 = vmatprep.subr.mxu0 0.0
    %1415 = vmatpush2.msra.mxu0 0.0
    %1416 = vmatprep.subr.mxu0 0.0
    %1417 = vmatpush2.msra.mxu0 0.0
    %1418 = vmatprep.subr.mxu0 0.0
    %1419 = vmatpush2.msra.mxu0 0.0
    %1420 = vmatprep.subr.mxu0 0.0
    %1421 = vmatpush2.msra.mxu0 0.0
    %1422 = vmatprep.subr.mxu0 0.0
    %1423 = vmatpush2.msra.mxu0 0.0
    %1424 = vmatprep.subr.mxu0 0.0
    %1425 = vmatpush2.msra.mxu0 0.0
    %1426 = vmatprep.subr.mxu0 0.0
    %1427 = vmatpush2.msra.mxu0 0.0
    %1428 = vmatprep.subr.mxu0 0.0
    %1429 = vmatpush2.msra.mxu0 0.0
    %1430 = vmatprep.subr.mxu0 0.0
    %1431 = vmatpush2.msra.mxu0 0.0
    %1432 = vmatprep.subr.mxu0 0.0
    %1433 = vmatpush2.msra.mxu0 0.0
    %1434 = vmatprep.subr.mxu0 0.0
    %1435 = vmatpush2.msra.mxu0 0.0
    %1436 = vmatprep.mubr.f32.mxu0 0.0
    %1437 = vmatmul.mubr.f32.gmra.mxu0 %v1370
    %v1438 = vpop.f32.mrf.mxu0
    %v1439 = vadd.f32 %v1364, %v1438
    %v1440 = vpop.f32.mrf.mxu0
    %1441 = vdwg.mxu0
    %v1442 = vlaneseq
    %v1443 = vand.u32 %v1442, 127
    %vm1444 = vcmp.lt.s32.totalorder %v1443, 5
    %v1445 = vsel %vm1444, %v1439, -1e+30
    %vm1446 = vcmask 1041408
    %v1447 = vsel %vm1446, %v1445, -inf
    %1448 = vmax.xlane.f32.xlu0 %v1447
    %v1449 = vpop.xlane.xlu0 %1448
    %v1450 = vsub.f32 %v1445, %v1449
    %v1451 = vmul.f32 %v1450, 1.442695
    %v1452 = vpow.pop %v1451
    %v1453 = vsel %vm1446, %v1452, 0.0
    %1454 = vadd.xlane.f32.xlu0 %v1453
    %v1455 = vpop.xlane.xlu0 %1454
    %v1456 = vlog2.pop %v1455
    %v1457 = vmul.f32 %v1456, 0.6931472
    %v1458 = vsub.f32 %v1450, %v1457
    %1459 = vst [vmem:[#allocation20] sm:$0x3] %v1458
    // Predicated region
    $region102: #{forward.1} parent=1 // pred_check
      _
    $region103: #{forward.1} parent=1 // pred_check_branch
      %1461 = sbr.rel (0) target = $region105
    $region104: #{forward.1} parent=1 // pred_region
      %s1463 = ssub.s32 32, 32
      %1464 = vsyncadd [#allocation5], %s1463
      %s1466 = sshll.u32 [#allocation20], 4
      %s1467 = int_to_ptr.vmem [resolvable:$true] %s1466
      %1469 = dma.vmem_to_hbm [thread:$0]  %s1467, 32, %s15, [#allocation5]
    $region105: #{forward.1} parent=1 // pred_fallthru
      _
    // Predicated region
    $region106: #{forward.1} parent=1 // pred_check
      _
    $region107: #{forward.1} parent=1 // pred_check_branch
      %1471 = sbr.rel (0) target = $region109
    $region108: #{forward.1} parent=1 // pred_region
      %1472 = dma.done [#allocation5], 32
    $region109: #{forward.1} parent=1 // pred_fallthru
      _
    %1473 = vsyncpa [#allocation4], 1
    %1474 = vsyncpa [#allocation7], 1
    %1475 = vsyncpa [#allocation10], 1
    %1476 = vsyncpa [#allocation13], 1
    %1477 = vsyncpa [#allocation16], 1
    %1478 = vsyncpa [#allocation19], 1
    %1479 = vsyncpa [#allocation5], 1

</llo_original>
